<compile_context>
chip_gen: v6e
topology: v6e:2x2x1
jax: 0.10.0
libtpu: 0.0.40
codegen_flags: <defaults>
</compile_context>

<pallas_src>
import math

import jax
import jax.numpy as jnp
import numpy as np
from jax.experimental import pallas as pl
from jax.experimental.pallas import tpu as pltpu

# ---- model dimensions (small, consistent with the module) -------------------
BATCH = 2
SEQ = 8          # seq_len
HIDDEN = 32      # hidden_dim
HEADS = 4        # heads_de
HEAD_DIM = HIDDEN // HEADS
TOTAL_IN = 10    # total_in  (vocab = total_in + 1, padding_idx = 0)
EPS = 1e-5       # nn.LayerNorm default
BS = BATCH * SEQ # stacked batch*seq rows
NEG = -1e30      # additive mask value (robust finite "-inf")

# Lane offsets of each pre-transposed weight inside the packed weight slab.
# Column starts are 128-aligned so ref slices never need lane rotations.
_COL_WIN1 = 0      # [H, 3H]  self-attn  in_proj^T
_COL_WOUT1 = 128   # [H, H]   self-attn  out_proj^T
_COL_WIN2 = 256    # [H, 3H]  cross-attn in_proj^T
_COL_WOUT2 = 384   # [H, H]   cross-attn out_proj^T
_COL_FW1 = 512     # [H, H]   ffn layer1^T
_COL_FW2 = 640     # [H, H]   ffn layer2^T
W_COLS = 672


# ---- fused Pallas kernel: whole decoder block, single invocation -------------
def decoder_kernel(x_ref, en_ref, pos_ref, bias_ref, w_ref, b_ref, ln_ref, o_ref):
    H, NH, HD = HIDDEN, HEADS, HEAD_DIM
    scale = 1.0 / math.sqrt(HD)

    # x = embd_in(ids) + embd_pos  (both sequences stacked along rows)
    x = x_ref[...] + jnp.tile(pos_ref[...], (BATCH, 1))          # [BS, H]
    en = en_ref[...]                                             # [BS, H]
    attn_bias = bias_ref[...]                                    # [BS, BS], 0 / -1e30

    def layer_norm(v, g_row, b_row):
        g = ln_ref[g_row:g_row + 1, :]                           # [1, H]
        b = ln_ref[b_row:b_row + 1, :]
        mu = jnp.mean(v, axis=-1, keepdims=True)
        var = jnp.mean(jnp.square(v - mu), axis=-1, keepdims=True)
        return (v - mu) * jax.lax.rsqrt(var + EPS) * g + b

    def split_heads(t):                                          # [BS, H] -> [NH, BS, HD]
        return jnp.stack([t[:, h * HD:(h + 1) * HD] for h in range(NH)], axis=0)

    def merge_heads(t):                                          # [NH, BS, HD] -> [BS, H]
        return jnp.concatenate([t[h] for h in range(NH)], axis=-1)

    def attention(q, k, v, wout_col):
        # q, k, v: [BS, H] (bias already added; PyTorch scales q after in_proj)
        qh = split_heads(q) * scale
        kh = split_heads(k)
        vh = split_heads(v)
        s = jnp.einsum('hqd,hkd->hqk', qh, kh,
                       preferred_element_type=jnp.float32)       # [NH, BS, BS]
        s = s + attn_bias                                        # block-diag causal
        m = jnp.max(s, axis=-1, keepdims=True)
        e = jnp.exp(s - m)
        p = e / jnp.sum(e, axis=-1, keepdims=True)
        ctx = jnp.einsum('hqk,hkd->hqd', p, vh,
                         preferred_element_type=jnp.float32)     # [NH, BS, HD]
        ctx = merge_heads(ctx)                                   # [BS, H]
        wout = w_ref[:, wout_col:wout_col + H]
        bout = b_ref[:, wout_col:wout_col + H]
        return jnp.dot(ctx, wout, preferred_element_type=jnp.float32) + bout

    # ---- M1 = LN1(x) + SelfAttention(LN1(x)) --------------------------------
    xn = layer_norm(x, 0, 1)
    qkv = jnp.dot(xn, w_ref[:, _COL_WIN1:_COL_WIN1 + 3 * H],
                  preferred_element_type=jnp.float32) + b_ref[:, _COL_WIN1:_COL_WIN1 + 3 * H]
    out = xn + attention(qkv[:, 0:H], qkv[:, H:2 * H], qkv[:, 2 * H:3 * H], _COL_WOUT1)

    # ---- M2 = M1 + CrossAttention(Q = M1, K = V = LN2(en_out)) --------------
    en_n = layer_norm(en, 2, 3)
    win2 = w_ref[:, _COL_WIN2:_COL_WIN2 + 3 * H]                 # aligned load, slice value
    bin2 = b_ref[:, _COL_WIN2:_COL_WIN2 + 3 * H]
    q2 = jnp.dot(out, win2[:, 0:H], preferred_element_type=jnp.float32) + bin2[:, 0:H]
    kv2 = jnp.dot(en_n, win2[:, H:3 * H], preferred_element_type=jnp.float32) + bin2[:, H:3 * H]
    out = out + attention(q2, kv2[:, 0:H], kv2[:, H:2 * H], _COL_WOUT2)

    # ---- L = LN3(M2) + FFN(LN3(M2)) ------------------------------------------
    out_n = layer_norm(out, 4, 5)
    h1 = jnp.maximum(
        jnp.dot(out_n, w_ref[:, _COL_FW1:_COL_FW1 + H],
                preferred_element_type=jnp.float32) + b_ref[:, _COL_FW1:_COL_FW1 + H],
        0.0)
    ffn = jnp.dot(h1, w_ref[:, _COL_FW2:_COL_FW2 + H],
                  preferred_element_type=jnp.float32) + b_ref[:, _COL_FW2:_COL_FW2 + H]
    o_ref[...] = ffn + out_n


# ---- wrapper ------------------------------------------------------------------
def _full_spec(shape):
    nd = len(shape)
    return pl.BlockSpec(shape, lambda i, nd=nd: (0,) * nd)


@jax.jit
def decoder_block_pallas(x_emb, en_out, pos_emb, attn_bias, w_slab, b_slab, ln_slab):
    """x_emb, en_out: [B, S, H] f32; pos_emb: [S, H]; attn_bias: [B*S, B*S];
    w_slab: [H, 672]; b_slab: [1, 672]; ln_slab: [6, H]."""
    x_stk = x_emb.reshape(BS, HIDDEN)
    en_stk = en_out.reshape(BS, HIDDEN)
    inputs = (x_stk, en_stk, pos_emb, attn_bias, w_slab, b_slab, ln_slab)
    out = pl.pallas_call(
        decoder_kernel,
        out_shape=jax.ShapeDtypeStruct((BS, HIDDEN), jnp.float32),
        grid=(1,),
        in_specs=[_full_spec(a.shape) for a in inputs],
        out_specs=_full_spec((BS, HIDDEN)),
        compiler_params=pltpu.CompilerParams(dimension_semantics=("arbitrary",)),
    )(*inputs)
    return out.reshape(BATCH, SEQ, HIDDEN)


def pack_params(params):
    """Pack the 18 per-layer tensors into 3 slabs (weights pre-transposed)."""
    (ln1g, ln1b, ln2g, ln2b, ln3g, ln3b,
     win1, bin1, wout1, bout1,
     win2, bin2, wout2, bout2,
     fw1, fb1, fw2, fb2) = params
    w = np.zeros((HIDDEN, W_COLS), np.float32)
    b = np.zeros((1, W_COLS), np.float32)

    def put(col, wt, bt):
        wt = np.asarray(wt)
        bt = np.asarray(bt)
        w[:, col:col + wt.shape[0]] = wt.T
        b[:, col:col + bt.shape[1]] = bt

    put(_COL_WIN1, win1, bin1)
    put(_COL_WOUT1, wout1, bout1)
    put(_COL_WIN2, win2, bin2)
    put(_COL_WOUT2, wout2, bout2)
    put(_COL_FW1, fw1, fb1)
    put(_COL_FW2, fw2, fb2)
    ln = np.concatenate([np.asarray(p) for p in
                         (ln1g, ln1b, ln2g, ln2b, ln3g, ln3b)], axis=0)  # [6, H]
    return jnp.asarray(w), jnp.asarray(b), jnp.asarray(ln)


def build_attn_bias():
    """Block-diagonal causal additive mask for the stacked [B*S, B*S] scores."""
    allowed = np.kron(np.eye(BATCH, dtype=np.float32),
                      np.tril(np.ones((SEQ, SEQ), np.float32)))
    return jnp.asarray((1.0 - allowed) * NEG)


# ---- pure-JAX reference (faithful transcription of the PyTorch forward) -------
def _layer_norm_ref(x, g, b):
    mu = jnp.mean(x, axis=-1, keepdims=True)
    var = jnp.mean(jnp.square(x - mu), axis=-1, keepdims=True)
    return (x - mu) * jax.lax.rsqrt(var + EPS) * g + b


def _mha_ref(q_in, kv_in, w_in, b_in, w_out, b_out):
    H = HIDDEN
    q = jnp.dot(q_in, w_in[0:H].T) + b_in[:, 0:H]
    k = jnp.dot(kv_in, w_in[H:2 * H].T) + b_in[:, H:2 * H]
    v = jnp.dot(kv_in, w_in[2 * H:3 * H].T) + b_in[:, 2 * H:3 * H]
    q = q * (1.0 / math.sqrt(HEAD_DIM))
    S = q_in.shape[0]
    causal = np.triu(np.ones((S, S), bool), k=1)      # True == masked
    heads_out = []
    for h in range(HEADS):
        lo, hi = h * HEAD_DIM, (h + 1) * HEAD_DIM
        s = jnp.dot(q[:, lo:hi], k[:, lo:hi].T)
        s = jnp.where(causal, -jnp.inf, s)
        p = jax.nn.softmax(s, axis=-1)
        heads_out.append(jnp.dot(p, v[:, lo:hi]))
    ctx = jnp.concatenate(heads_out, axis=-1)
    return jnp.dot(ctx, w_out.T) + b_out


def decoder_block_ref(x_emb, en_out, pos_emb, params):
    (ln1g, ln1b, ln2g, ln2b, ln3g, ln3b,
     win1, bin1, wout1, bout1,
     win2, bin2, wout2, bout2,
     fw1, fb1, fw2, fb2) = params

    def one(x, en):
        x = x + pos_emb
        xn = _layer_norm_ref(x, ln1g, ln1b)
        out = xn + _mha_ref(xn, xn, win1, bin1, wout1, bout1)
        en_n = _layer_norm_ref(en, ln2g, ln2b)
        out = out + _mha_ref(out, en_n, win2, bin2, wout2, bout2)
        out_n = _layer_norm_ref(out, ln3g, ln3b)
        h1 = jnp.maximum(jnp.dot(out_n, fw1.T) + fb1, 0.0)
        return jnp.dot(h1, fw2.T) + fb2 + out_n

    return jax.vmap(one)(x_emb, en_out)


if __name__ == "__main__":
    key = jax.random.PRNGKey(0)
    ks = jax.random.split(key, 24)
    H = HIDDEN

    # deterministic "weights"
    embd_in = (jax.random.normal(ks[0], (TOTAL_IN + 1, H), jnp.float32) * 0.1
               ).at[0].set(0.0)                                  # padding_idx=0
    embd_pos = jax.random.normal(ks[1], (SEQ, H), jnp.float32) * 0.1

    ln1g = 1.0 + 0.1 * jax.random.normal(ks[16], (1, H), jnp.float32)
    ln1b = 0.01 * jax.random.normal(ks[17], (1, H), jnp.float32)
    ln2g = 1.0 + 0.1 * jax.random.normal(ks[18], (1, H), jnp.float32)
    ln2b = 0.01 * jax.random.normal(ks[19], (1, H), jnp.float32)
    ln3g = 1.0 + 0.1 * jax.random.normal(ks[20], (1, H), jnp.float32)
    ln3b = 0.01 * jax.random.normal(ks[21], (1, H), jnp.float32)

    win1 = jax.random.normal(ks[2], (3 * H, H), jnp.float32) * 0.1
    bin1 = jax.random.normal(ks[3], (1, 3 * H), jnp.float32) * 0.01
    wout1 = jax.random.normal(ks[4], (H, H), jnp.float32) * 0.1
    bout1 = jax.random.normal(ks[5], (1, H), jnp.float32) * 0.01

    win2 = jax.random.normal(ks[6], (3 * H, H), jnp.float32) * 0.1
    bin2 = jax.random.normal(ks[7], (1, 3 * H), jnp.float32) * 0.01
    wout2 = jax.random.normal(ks[8], (H, H), jnp.float32) * 0.1
    bout2 = jax.random.normal(ks[9], (1, H), jnp.float32) * 0.01

    fw1 = jax.random.normal(ks[10], (H, H), jnp.float32) * 0.1
    fb1 = jax.random.normal(ks[11], (1, H), jnp.float32) * 0.01
    fw2 = jax.random.normal(ks[12], (H, H), jnp.float32) * 0.1
    fb2 = jax.random.normal(ks[13], (1, H), jnp.float32) * 0.01

    params = [ln1g, ln1b, ln2g, ln2b, ln3g, ln3b,
              win1, bin1, wout1, bout1,
              win2, bin2, wout2, bout2,
              fw1, fb1, fw2, fb2]

    # deterministic inputs (first_block=True path: token ids -> embedding glue)
    ids = jax.random.randint(ks[14], (BATCH, SEQ), 0, TOTAL_IN + 1)
    x_emb = embd_in[ids]                                          # [B, S, H]
    en_out = jax.random.normal(ks[15], (BATCH, SEQ, H), jnp.float32) * 0.5

    # one-time parameter packing / mask construction (weight-layout prep)
    w_slab, b_slab, ln_slab = pack_params(params)
    attn_bias = build_attn_bias()

    out = decoder_block_pallas(x_emb, en_out, embd_pos, attn_bias,
                               w_slab, b_slab, ln_slab)
    out = jax.block_until_ready(out)

    ref = jax.block_until_ready(decoder_block_ref(x_emb, en_out, embd_pos, params))
    np.testing.assert_allclose(np.asarray(out), np.asarray(ref), rtol=1e-3, atol=1e-3)

    print("KERNEL_OK")
</pallas_src>

<mosaic_0001>
module attributes {stable_mosaic.version = 11 : i64} {
  func.func @decoder_kernel(%arg0: i32, %arg1: memref<16x32xf32, #tpu.memory_space<vmem>>, %arg2: memref<16x32xf32, #tpu.memory_space<vmem>>, %arg3: memref<8x32xf32, #tpu.memory_space<vmem>>, %arg4: memref<16x16xf32, #tpu.memory_space<vmem>>, %arg5: memref<32x672xf32, #tpu.memory_space<vmem>>, %arg6: memref<1x672xf32, #tpu.memory_space<vmem>>, %arg7: memref<6x32xf32, #tpu.memory_space<vmem>>, %arg8: memref<16x32xf32, #tpu.memory_space<vmem>>) attributes {dimension_semantics = [#tpu.dimension_semantics<arbitrary>], iteration_bounds = array<i64: 1>, scalar_prefetch = 0 : i64, scratch_operands = 0 : i64, tpu.core_type = #tpu.core_type<tc>, window_params = [{pipeline_mode = #tpu.pipeline_mode<synchronous>, transform_indices = @transform_0, window_bounds = array<i64: 16, 32>}, {pipeline_mode = #tpu.pipeline_mode<synchronous>, transform_indices = @transform_1, window_bounds = array<i64: 16, 32>}, {pipeline_mode = #tpu.pipeline_mode<synchronous>, transform_indices = @transform_2, window_bounds = array<i64: 8, 32>}, {pipeline_mode = #tpu.pipeline_mode<synchronous>, transform_indices = @transform_3, window_bounds = array<i64: 16, 16>}, {pipeline_mode = #tpu.pipeline_mode<synchronous>, transform_indices = @transform_4, window_bounds = array<i64: 32, 672>}, {pipeline_mode = #tpu.pipeline_mode<synchronous>, transform_indices = @transform_5, window_bounds = array<i64: 1, 672>}, {pipeline_mode = #tpu.pipeline_mode<synchronous>, transform_indices = @transform_6, window_bounds = array<i64: 6, 32>}, {pipeline_mode = #tpu.pipeline_mode<synchronous>, transform_indices = @transform_7, window_bounds = array<i64: 16, 32>}]} {
    %c0 = arith.constant 0 : index
    %c0_0 = arith.constant 0 : index
    %0 = vector.load %arg1[%c0, %c0_0] : memref<16x32xf32, #tpu.memory_space<vmem>>, vector<16x32xf32>
    %c0_1 = arith.constant 0 : index
    %c0_2 = arith.constant 0 : index
    %1 = vector.load %arg3[%c0_1, %c0_2] : memref<8x32xf32, #tpu.memory_space<vmem>>, vector<8x32xf32>
    %2 = tpu.concatenate %1, %1 in 0 : vector<8x32xf32>, vector<8x32xf32> -> vector<16x32xf32>
    %3 = arith.addf %0, %2 : vector<16x32xf32>
    %c0_3 = arith.constant 0 : index
    %c0_4 = arith.constant 0 : index
    %4 = vector.load %arg2[%c0_3, %c0_4] : memref<16x32xf32, #tpu.memory_space<vmem>>, vector<16x32xf32>
    %c0_5 = arith.constant 0 : index
    %c0_6 = arith.constant 0 : index
    %5 = vector.load %arg4[%c0_5, %c0_6] : memref<16x16xf32, #tpu.memory_space<vmem>>, vector<16x16xf32>
    %c0_7 = arith.constant 0 : index
    %c0_8 = arith.constant 0 : index
    %6 = vector.load %arg7[%c0_7, %c0_8] : memref<6x32xf32, #tpu.memory_space<vmem>>, vector<1x32xf32>
    %c1 = arith.constant 1 : index
    %c0_9 = arith.constant 0 : index
    %7 = vector.load %arg7[%c1, %c0_9] : memref<6x32xf32, #tpu.memory_space<vmem>>, vector<1x32xf32>
    %cst = arith.constant dense<0.000000e+00> : vector<16xf32>
    %8 = vector.multi_reduction <add>, %3, %cst [1] : vector<16x32xf32> to vector<16xf32>
    %9 = vector.shape_cast %8 : vector<16xf32> to vector<16x1xf32>
    %cst_10 = arith.constant 3.200000e+01 : f32
    %10 = vector.broadcast %cst_10 : f32 to vector<16x1xf32>
    %11 = arith.divf %9, %10 : vector<16x1xf32>
    %12 = vector.broadcast %11 : vector<16x1xf32> to vector<16x32xf32>
    %13 = arith.subf %3, %12 : vector<16x32xf32>
    %14 = arith.mulf %13, %13 : vector<16x32xf32>
    %cst_11 = arith.constant dense<0.000000e+00> : vector<16xf32>
    %15 = vector.multi_reduction <add>, %14, %cst_11 [1] : vector<16x32xf32> to vector<16xf32>
    %16 = vector.shape_cast %15 : vector<16xf32> to vector<16x1xf32>
    %cst_12 = arith.constant 3.200000e+01 : f32
    %17 = vector.broadcast %cst_12 : f32 to vector<16x1xf32>
    %18 = arith.divf %16, %17 : vector<16x1xf32>
    %19 = vector.broadcast %11 : vector<16x1xf32> to vector<16x32xf32>
    %20 = arith.subf %3, %19 : vector<16x32xf32>
    %cst_13 = arith.constant 9.99999974E-6 : f32
    %21 = vector.broadcast %cst_13 : f32 to vector<16x1xf32>
    %22 = arith.addf %18, %21 : vector<16x1xf32>
    %23 = math.rsqrt %22 : vector<16x1xf32>
    %24 = vector.broadcast %23 : vector<16x1xf32> to vector<16x32xf32>
    %25 = arith.mulf %20, %24 : vector<16x32xf32>
    %26 = vector.broadcast %6 : vector<1x32xf32> to vector<16x32xf32>
    %27 = arith.mulf %25, %26 : vector<16x32xf32>
    %28 = vector.broadcast %7 : vector<1x32xf32> to vector<16x32xf32>
    %29 = arith.addf %27, %28 : vector<16x32xf32>
    %c0_14 = arith.constant 0 : index
    %c0_15 = arith.constant 0 : index
    %30 = vector.load %arg5[%c0_14, %c0_15] : memref<32x672xf32, #tpu.memory_space<vmem>>, vector<32x96xf32>
    %cst_16 = arith.constant dense<0.000000e+00> : vector<16x96xf32>
    %31 = tpu.matmul %29, %30, %cst_16 {dimension_numbers = #tpu.dot_dimension_numbers<[1], [0], [0], [1], [0, 0, 1, 1], [], []>} : vector<16x32xf32>, vector<32x96xf32>, vector<16x96xf32> -> vector<16x96xf32>
    %c0_17 = arith.constant 0 : index
    %c0_18 = arith.constant 0 : index
    %32 = vector.load %arg6[%c0_17, %c0_18] : memref<1x672xf32, #tpu.memory_space<vmem>>, vector<1x96xf32>
    %33 = vector.broadcast %32 : vector<1x96xf32> to vector<16x96xf32>
    %34 = arith.addf %31, %33 : vector<16x96xf32>
    %35 = vector.extract_strided_slice %34 {offsets = [0, 0], sizes = [16, 32], strides = [1, 1]} : vector<16x96xf32> to vector<16x32xf32>
    %36 = vector.extract_strided_slice %34 {offsets = [0, 32], sizes = [16, 32], strides = [1, 1]} : vector<16x96xf32> to vector<16x32xf32>
    %37 = vector.extract_strided_slice %34 {offsets = [0, 64], sizes = [16, 32], strides = [1, 1]} : vector<16x96xf32> to vector<16x32xf32>
    %38 = vector.extract_strided_slice %35 {offsets = [0, 0], sizes = [16, 8], strides = [1, 1]} : vector<16x32xf32> to vector<16x8xf32>
    %39 = vector.extract_strided_slice %35 {offsets = [0, 8], sizes = [16, 8], strides = [1, 1]} : vector<16x32xf32> to vector<16x8xf32>
    %40 = vector.extract_strided_slice %35 {offsets = [0, 16], sizes = [16, 8], strides = [1, 1]} : vector<16x32xf32> to vector<16x8xf32>
    %41 = vector.extract_strided_slice %35 {offsets = [0, 24], sizes = [16, 8], strides = [1, 1]} : vector<16x32xf32> to vector<16x8xf32>
    %42 = vector.shape_cast %38 : vector<16x8xf32> to vector<1x16x8xf32>
    %43 = vector.shape_cast %39 : vector<16x8xf32> to vector<1x16x8xf32>
    %44 = vector.shape_cast %40 : vector<16x8xf32> to vector<1x16x8xf32>
    %45 = vector.shape_cast %41 : vector<16x8xf32> to vector<1x16x8xf32>
    %46 = tpu.concatenate %42, %43, %44, %45 in 0 : vector<1x16x8xf32>, vector<1x16x8xf32>, vector<1x16x8xf32>, vector<1x16x8xf32> -> vector<4x16x8xf32>
    %cst_19 = arith.constant 0.353553385 : f32
    %47 = vector.broadcast %cst_19 : f32 to vector<4x16x8xf32>
    %48 = arith.mulf %46, %47 : vector<4x16x8xf32>
    %49 = vector.extract_strided_slice %36 {offsets = [0, 0], sizes = [16, 8], strides = [1, 1]} : vector<16x32xf32> to vector<16x8xf32>
    %50 = vector.extract_strided_slice %36 {offsets = [0, 8], sizes = [16, 8], strides = [1, 1]} : vector<16x32xf32> to vector<16x8xf32>
    %51 = vector.extract_strided_slice %36 {offsets = [0, 16], sizes = [16, 8], strides = [1, 1]} : vector<16x32xf32> to vector<16x8xf32>
    %52 = vector.extract_strided_slice %36 {offsets = [0, 24], sizes = [16, 8], strides = [1, 1]} : vector<16x32xf32> to vector<16x8xf32>
    %53 = vector.shape_cast %49 : vector<16x8xf32> to vector<1x16x8xf32>
    %54 = vector.shape_cast %50 : vector<16x8xf32> to vector<1x16x8xf32>
    %55 = vector.shape_cast %51 : vector<16x8xf32> to vector<1x16x8xf32>
    %56 = vector.shape_cast %52 : vector<16x8xf32> to vector<1x16x8xf32>
    %57 = tpu.concatenate %53, %54, %55, %56 in 0 : vector<1x16x8xf32>, vector<1x16x8xf32>, vector<1x16x8xf32>, vector<1x16x8xf32> -> vector<4x16x8xf32>
    %58 = vector.extract_strided_slice %37 {offsets = [0, 0], sizes = [16, 8], strides = [1, 1]} : vector<16x32xf32> to vector<16x8xf32>
    %59 = vector.extract_strided_slice %37 {offsets = [0, 8], sizes = [16, 8], strides = [1, 1]} : vector<16x32xf32> to vector<16x8xf32>
    %60 = vector.extract_strided_slice %37 {offsets = [0, 16], sizes = [16, 8], strides = [1, 1]} : vector<16x32xf32> to vector<16x8xf32>
    %61 = vector.extract_strided_slice %37 {offsets = [0, 24], sizes = [16, 8], strides = [1, 1]} : vector<16x32xf32> to vector<16x8xf32>
    %62 = vector.shape_cast %58 : vector<16x8xf32> to vector<1x16x8xf32>
    %63 = vector.shape_cast %59 : vector<16x8xf32> to vector<1x16x8xf32>
    %64 = vector.shape_cast %60 : vector<16x8xf32> to vector<1x16x8xf32>
    %65 = vector.shape_cast %61 : vector<16x8xf32> to vector<1x16x8xf32>
    %66 = tpu.concatenate %62, %63, %64, %65 in 0 : vector<1x16x8xf32>, vector<1x16x8xf32>, vector<1x16x8xf32>, vector<1x16x8xf32> -> vector<4x16x8xf32>
    "tpu.trace_start"() <{level = 10 : i32, message = "hqd,hkd->hqk"}> : () -> ()
    %cst_20 = arith.constant dense<0.000000e+00> : vector<4x16x16xf32>
    %67 = tpu.matmul %48, %57, %cst_20 {dimension_numbers = #tpu.dot_dimension_numbers<[2], [2], [1], [1], [0, 0, 0, 1, 1, 1], [0], [0]>} : vector<4x16x8xf32>, vector<4x16x8xf32>, vector<4x16x16xf32> -> vector<4x16x16xf32>
    "tpu.trace_stop"() : () -> ()
    %68 = vector.shape_cast %5 : vector<16x16xf32> to vector<1x16x16xf32>
    %69 = vector.broadcast %68 : vector<1x16x16xf32> to vector<4x16x16xf32>
    %70 = arith.addf %67, %69 : vector<4x16x16xf32>
    %cst_21 = arith.constant dense<0xFF800000> : vector<4x16xf32>
    %71 = vector.multi_reduction <maximumf>, %70, %cst_21 [2] : vector<4x16x16xf32> to vector<4x16xf32>
    %72 = vector.shape_cast %71 : vector<4x16xf32> to vector<4x16x1xf32>
    %73 = vector.broadcast %72 : vector<4x16x1xf32> to vector<4x16x16xf32>
    %74 = arith.subf %70, %73 : vector<4x16x16xf32>
    %75 = math.exp %74 : vector<4x16x16xf32>
    %cst_22 = arith.constant dense<0.000000e+00> : vector<4x16xf32>
    %76 = vector.multi_reduction <add>, %75, %cst_22 [2] : vector<4x16x16xf32> to vector<4x16xf32>
    %77 = vector.shape_cast %76 : vector<4x16xf32> to vector<4x16x1xf32>
    %78 = vector.broadcast %77 : vector<4x16x1xf32> to vector<4x16x16xf32>
    %79 = arith.divf %75, %78 : vector<4x16x16xf32>
    "tpu.trace_start"() <{level = 10 : i32, message = "hqk,hkd->hqd"}> : () -> ()
    %cst_23 = arith.constant dense<0.000000e+00> : vector<4x16x8xf32>
    %80 = tpu.matmul %79, %66, %cst_23 {dimension_numbers = #tpu.dot_dimension_numbers<[2], [1], [1], [2], [0, 0, 0, 1, 1, 2], [0], [0]>} : vector<4x16x16xf32>, vector<4x16x8xf32>, vector<4x16x8xf32> -> vector<4x16x8xf32>
    "tpu.trace_stop"() : () -> ()
    %81 = vector.extract_strided_slice %80 {offsets = [0, 0, 0], sizes = [1, 16, 8], strides = [1, 1, 1]} : vector<4x16x8xf32> to vector<1x16x8xf32>
    %82 = vector.shape_cast %81 : vector<1x16x8xf32> to vector<16x8xf32>
    %83 = vector.extract_strided_slice %80 {offsets = [1, 0, 0], sizes = [1, 16, 8], strides = [1, 1, 1]} : vector<4x16x8xf32> to vector<1x16x8xf32>
    %84 = vector.shape_cast %83 : vector<1x16x8xf32> to vector<16x8xf32>
    %85 = vector.extract_strided_slice %80 {offsets = [2, 0, 0], sizes = [1, 16, 8], strides = [1, 1, 1]} : vector<4x16x8xf32> to vector<1x16x8xf32>
    %86 = vector.shape_cast %85 : vector<1x16x8xf32> to vector<16x8xf32>
    %87 = vector.extract_strided_slice %80 {offsets = [3, 0, 0], sizes = [1, 16, 8], strides = [1, 1, 1]} : vector<4x16x8xf32> to vector<1x16x8xf32>
    %88 = vector.shape_cast %87 : vector<1x16x8xf32> to vector<16x8xf32>
    %89 = tpu.concatenate %82, %84, %86, %88 in 1 : vector<16x8xf32>, vector<16x8xf32>, vector<16x8xf32>, vector<16x8xf32> -> vector<16x32xf32>
    %c0_24 = arith.constant 0 : index
    %c128 = arith.constant 128 : index
    %90 = vector.load %arg5[%c0_24, %c128] : memref<32x672xf32, #tpu.memory_space<vmem>>, vector<32x32xf32>
    %c0_25 = arith.constant 0 : index
    %c128_26 = arith.constant 128 : index
    %91 = vector.load %arg6[%c0_25, %c128_26] : memref<1x672xf32, #tpu.memory_space<vmem>>, vector<1x32xf32>
    %cst_27 = arith.constant dense<0.000000e+00> : vector<16x32xf32>
    %92 = tpu.matmul %89, %90, %cst_27 {dimension_numbers = #tpu.dot_dimension_numbers<[1], [0], [0], [1], [0, 0, 1, 1], [], []>} : vector<16x32xf32>, vector<32x32xf32>, vector<16x32xf32> -> vector<16x32xf32>
    %93 = vector.broadcast %91 : vector<1x32xf32> to vector<16x32xf32>
    %94 = arith.addf %92, %93 : vector<16x32xf32>
    %95 = arith.addf %29, %94 : vector<16x32xf32>
    %c2 = arith.constant 2 : index
    %c0_28 = arith.constant 0 : index
    %96 = vector.load %arg7[%c2, %c0_28] : memref<6x32xf32, #tpu.memory_space<vmem>>, vector<1x32xf32>
    %c3 = arith.constant 3 : index
    %c0_29 = arith.constant 0 : index
    %97 = vector.load %arg7[%c3, %c0_29] : memref<6x32xf32, #tpu.memory_space<vmem>>, vector<1x32xf32>
    %cst_30 = arith.constant dense<0.000000e+00> : vector<16xf32>
    %98 = vector.multi_reduction <add>, %4, %cst_30 [1] : vector<16x32xf32> to vector<16xf32>
    %99 = vector.shape_cast %98 : vector<16xf32> to vector<16x1xf32>
    %cst_31 = arith.constant 3.200000e+01 : f32
    %100 = vector.broadcast %cst_31 : f32 to vector<16x1xf32>
    %101 = arith.divf %99, %100 : vector<16x1xf32>
    %102 = vector.broadcast %101 : vector<16x1xf32> to vector<16x32xf32>
    %103 = arith.subf %4, %102 : vector<16x32xf32>
    %104 = arith.mulf %103, %103 : vector<16x32xf32>
    %cst_32 = arith.constant dense<0.000000e+00> : vector<16xf32>
    %105 = vector.multi_reduction <add>, %104, %cst_32 [1] : vector<16x32xf32> to vector<16xf32>
    %106 = vector.shape_cast %105 : vector<16xf32> to vector<16x1xf32>
    %cst_33 = arith.constant 3.200000e+01 : f32
    %107 = vector.broadcast %cst_33 : f32 to vector<16x1xf32>
    %108 = arith.divf %106, %107 : vector<16x1xf32>
    %109 = vector.broadcast %101 : vector<16x1xf32> to vector<16x32xf32>
    %110 = arith.subf %4, %109 : vector<16x32xf32>
    %cst_34 = arith.constant 9.99999974E-6 : f32
    %111 = vector.broadcast %cst_34 : f32 to vector<16x1xf32>
    %112 = arith.addf %108, %111 : vector<16x1xf32>
    %113 = math.rsqrt %112 : vector<16x1xf32>
    %114 = vector.broadcast %113 : vector<16x1xf32> to vector<16x32xf32>
    %115 = arith.mulf %110, %114 : vector<16x32xf32>
    %116 = vector.broadcast %96 : vector<1x32xf32> to vector<16x32xf32>
    %117 = arith.mulf %115, %116 : vector<16x32xf32>
    %118 = vector.broadcast %97 : vector<1x32xf32> to vector<16x32xf32>
    %119 = arith.addf %117, %118 : vector<16x32xf32>
    %c0_35 = arith.constant 0 : index
    %c256 = arith.constant 256 : index
    %120 = vector.load %arg5[%c0_35, %c256] : memref<32x672xf32, #tpu.memory_space<vmem>>, vector<32x96xf32>
    %c0_36 = arith.constant 0 : index
    %c256_37 = arith.constant 256 : index
    %121 = vector.load %arg6[%c0_36, %c256_37] : memref<1x672xf32, #tpu.memory_space<vmem>>, vector<1x96xf32>
    %122 = vector.extract_strided_slice %120 {offsets = [0, 0], sizes = [32, 32], strides = [1, 1]} : vector<32x96xf32> to vector<32x32xf32>
    %cst_38 = arith.constant dense<0.000000e+00> : vector<16x32xf32>
    %123 = tpu.matmul %95, %122, %cst_38 {dimension_numbers = #tpu.dot_dimension_numbers<[1], [0], [0], [1], [0, 0, 1, 1], [], []>} : vector<16x32xf32>, vector<32x32xf32>, vector<16x32xf32> -> vector<16x32xf32>
    %124 = vector.extract_strided_slice %121 {offsets = [0, 0], sizes = [1, 32], strides = [1, 1]} : vector<1x96xf32> to vector<1x32xf32>
    %125 = vector.broadcast %124 : vector<1x32xf32> to vector<16x32xf32>
    %126 = arith.addf %123, %125 : vector<16x32xf32>
    %127 = vector.extract_strided_slice %120 {offsets = [0, 32], sizes = [32, 64], strides = [1, 1]} : vector<32x96xf32> to vector<32x64xf32>
    %cst_39 = arith.constant dense<0.000000e+00> : vector<16x64xf32>
    %128 = tpu.matmul %119, %127, %cst_39 {dimension_numbers = #tpu.dot_dimension_numbers<[1], [0], [0], [1], [0, 0, 1, 1], [], []>} : vector<16x32xf32>, vector<32x64xf32>, vector<16x64xf32> -> vector<16x64xf32>
    %129 = vector.extract_strided_slice %121 {offsets = [0, 32], sizes = [1, 64], strides = [1, 1]} : vector<1x96xf32> to vector<1x64xf32>
    %130 = vector.broadcast %129 : vector<1x64xf32> to vector<16x64xf32>
    %131 = arith.addf %128, %130 : vector<16x64xf32>
    %132 = vector.extract_strided_slice %131 {offsets = [0, 0], sizes = [16, 32], strides = [1, 1]} : vector<16x64xf32> to vector<16x32xf32>
    %133 = vector.extract_strided_slice %131 {offsets = [0, 32], sizes = [16, 32], strides = [1, 1]} : vector<16x64xf32> to vector<16x32xf32>
    %134 = vector.extract_strided_slice %126 {offsets = [0, 0], sizes = [16, 8], strides = [1, 1]} : vector<16x32xf32> to vector<16x8xf32>
    %135 = vector.extract_strided_slice %126 {offsets = [0, 8], sizes = [16, 8], strides = [1, 1]} : vector<16x32xf32> to vector<16x8xf32>
    %136 = vector.extract_strided_slice %126 {offsets = [0, 16], sizes = [16, 8], strides = [1, 1]} : vector<16x32xf32> to vector<16x8xf32>
    %137 = vector.extract_strided_slice %126 {offsets = [0, 24], sizes = [16, 8], strides = [1, 1]} : vector<16x32xf32> to vector<16x8xf32>
    %138 = vector.shape_cast %134 : vector<16x8xf32> to vector<1x16x8xf32>
    %139 = vector.shape_cast %135 : vector<16x8xf32> to vector<1x16x8xf32>
    %140 = vector.shape_cast %136 : vector<16x8xf32> to vector<1x16x8xf32>
    %141 = vector.shape_cast %137 : vector<16x8xf32> to vector<1x16x8xf32>
    %142 = tpu.concatenate %138, %139, %140, %141 in 0 : vector<1x16x8xf32>, vector<1x16x8xf32>, vector<1x16x8xf32>, vector<1x16x8xf32> -> vector<4x16x8xf32>
    %cst_40 = arith.constant 0.353553385 : f32
    %143 = vector.broadcast %cst_40 : f32 to vector<4x16x8xf32>
    %144 = arith.mulf %142, %143 : vector<4x16x8xf32>
    %145 = vector.extract_strided_slice %132 {offsets = [0, 0], sizes = [16, 8], strides = [1, 1]} : vector<16x32xf32> to vector<16x8xf32>
    %146 = vector.extract_strided_slice %132 {offsets = [0, 8], sizes = [16, 8], strides = [1, 1]} : vector<16x32xf32> to vector<16x8xf32>
    %147 = vector.extract_strided_slice %132 {offsets = [0, 16], sizes = [16, 8], strides = [1, 1]} : vector<16x32xf32> to vector<16x8xf32>
    %148 = vector.extract_strided_slice %132 {offsets = [0, 24], sizes = [16, 8], strides = [1, 1]} : vector<16x32xf32> to vector<16x8xf32>
    %149 = vector.shape_cast %145 : vector<16x8xf32> to vector<1x16x8xf32>
    %150 = vector.shape_cast %146 : vector<16x8xf32> to vector<1x16x8xf32>
    %151 = vector.shape_cast %147 : vector<16x8xf32> to vector<1x16x8xf32>
    %152 = vector.shape_cast %148 : vector<16x8xf32> to vector<1x16x8xf32>
    %153 = tpu.concatenate %149, %150, %151, %152 in 0 : vector<1x16x8xf32>, vector<1x16x8xf32>, vector<1x16x8xf32>, vector<1x16x8xf32> -> vector<4x16x8xf32>
    %154 = vector.extract_strided_slice %133 {offsets = [0, 0], sizes = [16, 8], strides = [1, 1]} : vector<16x32xf32> to vector<16x8xf32>
    %155 = vector.extract_strided_slice %133 {offsets = [0, 8], sizes = [16, 8], strides = [1, 1]} : vector<16x32xf32> to vector<16x8xf32>
    %156 = vector.extract_strided_slice %133 {offsets = [0, 16], sizes = [16, 8], strides = [1, 1]} : vector<16x32xf32> to vector<16x8xf32>
    %157 = vector.extract_strided_slice %133 {offsets = [0, 24], sizes = [16, 8], strides = [1, 1]} : vector<16x32xf32> to vector<16x8xf32>
    %158 = vector.shape_cast %154 : vector<16x8xf32> to vector<1x16x8xf32>
    %159 = vector.shape_cast %155 : vector<16x8xf32> to vector<1x16x8xf32>
    %160 = vector.shape_cast %156 : vector<16x8xf32> to vector<1x16x8xf32>
    %161 = vector.shape_cast %157 : vector<16x8xf32> to vector<1x16x8xf32>
    %162 = tpu.concatenate %158, %159, %160, %161 in 0 : vector<1x16x8xf32>, vector<1x16x8xf32>, vector<1x16x8xf32>, vector<1x16x8xf32> -> vector<4x16x8xf32>
    "tpu.trace_start"() <{level = 10 : i32, message = "hqd,hkd->hqk"}> : () -> ()
    %cst_41 = arith.constant dense<0.000000e+00> : vector<4x16x16xf32>
    %163 = tpu.matmul %144, %153, %cst_41 {dimension_numbers = #tpu.dot_dimension_numbers<[2], [2], [1], [1], [0, 0, 0, 1, 1, 1], [0], [0]>} : vector<4x16x8xf32>, vector<4x16x8xf32>, vector<4x16x16xf32> -> vector<4x16x16xf32>
    "tpu.trace_stop"() : () -> ()
    %164 = vector.shape_cast %5 : vector<16x16xf32> to vector<1x16x16xf32>
    %165 = vector.broadcast %164 : vector<1x16x16xf32> to vector<4x16x16xf32>
    %166 = arith.addf %163, %165 : vector<4x16x16xf32>
    %cst_42 = arith.constant dense<0xFF800000> : vector<4x16xf32>
    %167 = vector.multi_reduction <maximumf>, %166, %cst_42 [2] : vector<4x16x16xf32> to vector<4x16xf32>
    %168 = vector.shape_cast %167 : vector<4x16xf32> to vector<4x16x1xf32>
    %169 = vector.broadcast %168 : vector<4x16x1xf32> to vector<4x16x16xf32>
    %170 = arith.subf %166, %169 : vector<4x16x16xf32>
    %171 = math.exp %170 : vector<4x16x16xf32>
    %cst_43 = arith.constant dense<0.000000e+00> : vector<4x16xf32>
    %172 = vector.multi_reduction <add>, %171, %cst_43 [2] : vector<4x16x16xf32> to vector<4x16xf32>
    %173 = vector.shape_cast %172 : vector<4x16xf32> to vector<4x16x1xf32>
    %174 = vector.broadcast %173 : vector<4x16x1xf32> to vector<4x16x16xf32>
    %175 = arith.divf %171, %174 : vector<4x16x16xf32>
    "tpu.trace_start"() <{level = 10 : i32, message = "hqk,hkd->hqd"}> : () -> ()
    %cst_44 = arith.constant dense<0.000000e+00> : vector<4x16x8xf32>
    %176 = tpu.matmul %175, %162, %cst_44 {dimension_numbers = #tpu.dot_dimension_numbers<[2], [1], [1], [2], [0, 0, 0, 1, 1, 2], [0], [0]>} : vector<4x16x16xf32>, vector<4x16x8xf32>, vector<4x16x8xf32> -> vector<4x16x8xf32>
    "tpu.trace_stop"() : () -> ()
    %177 = vector.extract_strided_slice %176 {offsets = [0, 0, 0], sizes = [1, 16, 8], strides = [1, 1, 1]} : vector<4x16x8xf32> to vector<1x16x8xf32>
    %178 = vector.shape_cast %177 : vector<1x16x8xf32> to vector<16x8xf32>
    %179 = vector.extract_strided_slice %176 {offsets = [1, 0, 0], sizes = [1, 16, 8], strides = [1, 1, 1]} : vector<4x16x8xf32> to vector<1x16x8xf32>
    %180 = vector.shape_cast %179 : vector<1x16x8xf32> to vector<16x8xf32>
    %181 = vector.extract_strided_slice %176 {offsets = [2, 0, 0], sizes = [1, 16, 8], strides = [1, 1, 1]} : vector<4x16x8xf32> to vector<1x16x8xf32>
    %182 = vector.shape_cast %181 : vector<1x16x8xf32> to vector<16x8xf32>
    %183 = vector.extract_strided_slice %176 {offsets = [3, 0, 0], sizes = [1, 16, 8], strides = [1, 1, 1]} : vector<4x16x8xf32> to vector<1x16x8xf32>
    %184 = vector.shape_cast %183 : vector<1x16x8xf32> to vector<16x8xf32>
    %185 = tpu.concatenate %178, %180, %182, %184 in 1 : vector<16x8xf32>, vector<16x8xf32>, vector<16x8xf32>, vector<16x8xf32> -> vector<16x32xf32>
    %c0_45 = arith.constant 0 : index
    %c384 = arith.constant 384 : index
    %186 = vector.load %arg5[%c0_45, %c384] : memref<32x672xf32, #tpu.memory_space<vmem>>, vector<32x32xf32>
    %c0_46 = arith.constant 0 : index
    %c384_47 = arith.constant 384 : index
    %187 = vector.load %arg6[%c0_46, %c384_47] : memref<1x672xf32, #tpu.memory_space<vmem>>, vector<1x32xf32>
    %cst_48 = arith.constant dense<0.000000e+00> : vector<16x32xf32>
    %188 = tpu.matmul %185, %186, %cst_48 {dimension_numbers = #tpu.dot_dimension_numbers<[1], [0], [0], [1], [0, 0, 1, 1], [], []>} : vector<16x32xf32>, vector<32x32xf32>, vector<16x32xf32> -> vector<16x32xf32>
    %189 = vector.broadcast %187 : vector<1x32xf32> to vector<16x32xf32>
    %190 = arith.addf %188, %189 : vector<16x32xf32>
    %191 = arith.addf %95, %190 : vector<16x32xf32>
    %c4 = arith.constant 4 : index
    %c0_49 = arith.constant 0 : index
    %192 = vector.load %arg7[%c4, %c0_49] : memref<6x32xf32, #tpu.memory_space<vmem>>, vector<1x32xf32>
    %c5 = arith.constant 5 : index
    %c0_50 = arith.constant 0 : index
    %193 = vector.load %arg7[%c5, %c0_50] : memref<6x32xf32, #tpu.memory_space<vmem>>, vector<1x32xf32>
    %cst_51 = arith.constant dense<0.000000e+00> : vector<16xf32>
    %194 = vector.multi_reduction <add>, %191, %cst_51 [1] : vector<16x32xf32> to vector<16xf32>
    %195 = vector.shape_cast %194 : vector<16xf32> to vector<16x1xf32>
    %cst_52 = arith.constant 3.200000e+01 : f32
    %196 = vector.broadcast %cst_52 : f32 to vector<16x1xf32>
    %197 = arith.divf %195, %196 : vector<16x1xf32>
    %198 = vector.broadcast %197 : vector<16x1xf32> to vector<16x32xf32>
    %199 = arith.subf %191, %198 : vector<16x32xf32>
    %200 = arith.mulf %199, %199 : vector<16x32xf32>
    %cst_53 = arith.constant dense<0.000000e+00> : vector<16xf32>
    %201 = vector.multi_reduction <add>, %200, %cst_53 [1] : vector<16x32xf32> to vector<16xf32>
    %202 = vector.shape_cast %201 : vector<16xf32> to vector<16x1xf32>
    %cst_54 = arith.constant 3.200000e+01 : f32
    %203 = vector.broadcast %cst_54 : f32 to vector<16x1xf32>
    %204 = arith.divf %202, %203 : vector<16x1xf32>
    %205 = vector.broadcast %197 : vector<16x1xf32> to vector<16x32xf32>
    %206 = arith.subf %191, %205 : vector<16x32xf32>
    %cst_55 = arith.constant 9.99999974E-6 : f32
    %207 = vector.broadcast %cst_55 : f32 to vector<16x1xf32>
    %208 = arith.addf %204, %207 : vector<16x1xf32>
    %209 = math.rsqrt %208 : vector<16x1xf32>
    %210 = vector.broadcast %209 : vector<16x1xf32> to vector<16x32xf32>
    %211 = arith.mulf %206, %210 : vector<16x32xf32>
    %212 = vector.broadcast %192 : vector<1x32xf32> to vector<16x32xf32>
    %213 = arith.mulf %211, %212 : vector<16x32xf32>
    %214 = vector.broadcast %193 : vector<1x32xf32> to vector<16x32xf32>
    %215 = arith.addf %213, %214 : vector<16x32xf32>
    %c0_56 = arith.constant 0 : index
    %c512 = arith.constant 512 : index
    %216 = vector.load %arg5[%c0_56, %c512] : memref<32x672xf32, #tpu.memory_space<vmem>>, vector<32x32xf32>
    %cst_57 = arith.constant dense<0.000000e+00> : vector<16x32xf32>
    %217 = tpu.matmul %215, %216, %cst_57 {dimension_numbers = #tpu.dot_dimension_numbers<[1], [0], [0], [1], [0, 0, 1, 1], [], []>} : vector<16x32xf32>, vector<32x32xf32>, vector<16x32xf32> -> vector<16x32xf32>
    %c0_58 = arith.constant 0 : index
    %c512_59 = arith.constant 512 : index
    %218 = vector.load %arg6[%c0_58, %c512_59] : memref<1x672xf32, #tpu.memory_space<vmem>>, vector<1x32xf32>
    %219 = vector.broadcast %218 : vector<1x32xf32> to vector<16x32xf32>
    %220 = arith.addf %217, %219 : vector<16x32xf32>
    %cst_60 = arith.constant 0.000000e+00 : f32
    %221 = vector.broadcast %cst_60 : f32 to vector<16x32xf32>
    %222 = arith.maximumf %220, %221 : vector<16x32xf32>
    %c0_61 = arith.constant 0 : index
    %c640 = arith.constant 640 : index
    %223 = vector.load %arg5[%c0_61, %c640] : memref<32x672xf32, #tpu.memory_space<vmem>>, vector<32x32xf32>
    %cst_62 = arith.constant dense<0.000000e+00> : vector<16x32xf32>
    %224 = tpu.matmul %222, %223, %cst_62 {dimension_numbers = #tpu.dot_dimension_numbers<[1], [0], [0], [1], [0, 0, 1, 1], [], []>} : vector<16x32xf32>, vector<32x32xf32>, vector<16x32xf32> -> vector<16x32xf32>
    %c0_63 = arith.constant 0 : index
    %c640_64 = arith.constant 640 : index
    %225 = vector.load %arg6[%c0_63, %c640_64] : memref<1x672xf32, #tpu.memory_space<vmem>>, vector<1x32xf32>
    %226 = vector.broadcast %225 : vector<1x32xf32> to vector<16x32xf32>
    %227 = arith.addf %224, %226 : vector<16x32xf32>
    %228 = arith.addf %227, %215 : vector<16x32xf32>
    %c0_65 = arith.constant 0 : index
    %c0_66 = arith.constant 0 : index
    %229 = vector.load %arg8[%c0_65, %c0_66] : memref<16x32xf32, #tpu.memory_space<vmem>>, vector<16x32xf32>
    tpu.vector_store %arg8[%c0_65, %c0_66], %228 {strides = array<i32>} : memref<16x32xf32, #tpu.memory_space<vmem>>, vector<16x32xf32>,
    return
  }
  func.func @transform_0(%arg0: i32) -> (i32, i32) {
    %c0_i32 = arith.constant 0 : i32
    %c0_i32_0 = arith.constant 0 : i32
    %c0_i32_1 = arith.constant 0 : i32
    return %c0_i32, %c0_i32_0 : i32, i32
  }
  func.func @transform_1(%arg0: i32) -> (i32, i32) {
    %c0_i32 = arith.constant 0 : i32
    %c0_i32_0 = arith.constant 0 : i32
    %c0_i32_1 = arith.constant 0 : i32
    return %c0_i32, %c0_i32_0 : i32, i32
  }
  func.func @transform_2(%arg0: i32) -> (i32, i32) {
    %c0_i32 = arith.constant 0 : i32
    %c0_i32_0 = arith.constant 0 : i32
    %c0_i32_1 = arith.constant 0 : i32
    return %c0_i32, %c0_i32_0 : i32, i32
  }
  func.func @transform_3(%arg0: i32) -> (i32, i32) {
    %c0_i32 = arith.constant 0 : i32
    %c0_i32_0 = arith.constant 0 : i32
    %c0_i32_1 = arith.constant 0 : i32
    return %c0_i32, %c0_i32_0 : i32, i32
  }
  func.func @transform_4(%arg0: i32) -> (i32, i32) {
    %c0_i32 = arith.constant 0 : i32
    %c0_i32_0 = arith.constant 0 : i32
    %c0_i32_1 = arith.constant 0 : i32
    return %c0_i32, %c0_i32_0 : i32, i32
  }
  func.func @transform_5(%arg0: i32) -> (i32, i32) {
    %c0_i32 = arith.constant 0 : i32
    %c0_i32_0 = arith.constant 0 : i32
    %c0_i32_1 = arith.constant 0 : i32
    return %c0_i32, %c0_i32_0 : i32, i32
  }
  func.func @transform_6(%arg0: i32) -> (i32, i32) {
    %c0_i32 = arith.constant 0 : i32
    %c0_i32_0 = arith.constant 0 : i32
    %c0_i32_1 = arith.constant 0 : i32
    return %c0_i32, %c0_i32_0 : i32, i32
  }
  func.func @transform_7(%arg0: i32) -> (i32, i32) {
    %c0_i32 = arith.constant 0 : i32
    %c0_i32_0 = arith.constant 0 : i32
    %c0_i32_1 = arith.constant 0 : i32
    return %c0_i32, %c0_i32_0 : i32, i32
  }
}

</mosaic_0001>

<llo_original>
// kernel: decoder_block_pallas.1
$region0: #{decoder_block_pallas.1}
  #allocation0 [shape = 'u32[]', space=smem, size = 0x4, offset = 0x4, fixed_abs, tag = 'smem constant byte address 0x4 - core index']
  #allocation1 [shape = 'u32[144,128]{1,0:T(1,128)}', space=vmem, size = 0x12000, scoped, tag = 'internal scratch']
  %s0 = inlined_call_operand.hbm [shape: f32[16,32], index: 0, kind: input, shape index: {}]
  %s1 = inlined_call_operand.hbm [shape: f32[16,32], index: 1, kind: input, shape index: {}]
  %s2 = inlined_call_operand.hbm [shape: f32[8,32], index: 2, kind: input, shape index: {}]
  %s3 = inlined_call_operand.hbm [shape: f32[16,16], index: 3, kind: input, shape index: {}]
  %s4 = inlined_call_operand.hbm [shape: f32[32,672], index: 4, kind: input, shape index: {}]
  %s5 = inlined_call_operand.vmem [shape: f32[1,672], index: 5, kind: input, shape index: {}]
  %s6 = inlined_call_operand.vmem [shape: f32[6,32], index: 6, kind: input, shape index: {}]
  %s7 = inlined_call_operand.hbm [shape: f32[16,32], index: 7, kind: output, shape index: {}]
  %s8 = sld [smem:[#allocation0]]
  $region58: #{decoder_block_pallas.1} parent=0
    _
  %s10 = ssub.s32 1, %s8
  %s11 = scalar_select 0, %s10, %s8
  $region1: #{decoder_block_pallas.1} parent=0
    #allocation2 [shape = 'u8[8192]{0}', space=vmem, size = 0x2000, scoped, tag = 'input window, operand 0, single buffered']
    #allocation3 [shape = 's32[1]{0}', space=sflag, size = 0x4, scoped, tag = 'scoped memory for decoder_block_pallas.1']
    #allocation4 [shape = 's32[1]{0}', space=sflag, size = 0x4, scoped, tag = 'scoped memory for decoder_block_pallas.1']
    #allocation5 [shape = 'u8[8192]{0}', space=vmem, size = 0x2000, scoped, tag = 'input window, operand 1, single buffered']
    #allocation6 [shape = 's32[1]{0}', space=sflag, size = 0x4, scoped, tag = 'scoped memory for decoder_block_pallas.1']
    #allocation7 [shape = 'u8[4096]{0}', space=vmem, size = 0x1000, scoped, tag = 'input window, operand 2, single buffered']
    #allocation8 [shape = 'u8[8192]{0}', space=vmem, size = 0x2000, scoped, tag = 'input window, operand 3, single buffered']
    #allocation9 [shape = 's32[1]{0}', space=sflag, size = 0x4, scoped, tag = 'scoped memory for decoder_block_pallas.1']
    #allocation10 [shape = 'u8[98304]{0}', space=vmem, size = 0x18000, scoped, tag = 'input window, operand 4, single buffered']
    #allocation11 [shape = 'u8[8192]{0}', space=vmem, size = 0x2000, scoped, tag = 'output window, operand 0, single buffered']
    %12 = vsyncpa [#allocation3], 0
    %13 = vsyncpa [#allocation6], 0
    %14 = vsyncpa [#allocation9], 0
    %15 = vsyncpa [#allocation4], 0
    // Predicated region
    $region2: #{decoder_block_pallas.1} parent=1 // pred_check
      _
    $region3: #{decoder_block_pallas.1} parent=1 // pred_check_branch
      %17 = sbr.rel (0) target = $region5
    $region4: #{decoder_block_pallas.1} parent=1 // pred_region
      %s19 = ssub.s32 256, 256
      %20 = vsyncadd [#allocation3], %s19
      %s21 = sshll.u32 [#allocation2], 4
      %s22 = int_to_ptr.vmem [resolvable:$true] %s21
      %27 = dma.hbm_to_vmem [thread:$0]  %s0, 256, %s22, [#allocation3], 128, 128, 8
    $region5: #{decoder_block_pallas.1} parent=1 // pred_fallthru
      _
    // Predicated region
    $region6: #{decoder_block_pallas.1} parent=1 // pred_check
      _
    $region7: #{decoder_block_pallas.1} parent=1 // pred_check_branch
      %29 = sbr.rel (0) target = $region9
    $region8: #{decoder_block_pallas.1} parent=1 // pred_region
      %s31 = ssub.s32 256, 256
      %32 = vsyncadd [#allocation6], %s31
      %s33 = sshll.u32 [#allocation5], 4
      %s34 = int_to_ptr.vmem [resolvable:$true] %s33
      %39 = dma.hbm_to_vmem [thread:$0]  %s1, 256, %s34, [#allocation6], 128, 128, 8
    $region9: #{decoder_block_pallas.1} parent=1 // pred_fallthru
      _
    // Predicated region
    $region10: #{decoder_block_pallas.1} parent=1 // pred_check
      _
    $region11: #{decoder_block_pallas.1} parent=1 // pred_check_branch
      %41 = sbr.rel (0) target = $region13
    $region12: #{decoder_block_pallas.1} parent=1 // pred_region
      %s43 = ssub.s32 128, 128
      %44 = vsyncadd [#allocation6], %s43
      %s46 = sshll.u32 [#allocation7], 4
      %s47 = int_to_ptr.vmem [resolvable:$true] %s46
      %49 = dma.hbm_to_vmem [thread:$0]  %s2, 128, %s47, [#allocation6]
    $region13: #{decoder_block_pallas.1} parent=1 // pred_fallthru
      _
    // Predicated region
    $region14: #{decoder_block_pallas.1} parent=1 // pred_check
      _
    $region15: #{decoder_block_pallas.1} parent=1 // pred_check_branch
      %51 = sbr.rel (0) target = $region17
    $region16: #{decoder_block_pallas.1} parent=1 // pred_region
      %s53 = ssub.s32 256, 256
      %54 = vsyncadd [#allocation9], %s53
      %s55 = sshll.u32 [#allocation8], 4
      %s56 = int_to_ptr.vmem [resolvable:$true] %s55
      %61 = dma.hbm_to_vmem [thread:$0]  %s3, 256, %s56, [#allocation9], 128, 128, 8
    $region17: #{decoder_block_pallas.1} parent=1 // pred_fallthru
      _
    // Predicated region
    $region18: #{decoder_block_pallas.1} parent=1 // pred_check
      _
    $region19: #{decoder_block_pallas.1} parent=1 // pred_check_branch
      %63 = sbr.rel (0) target = $region21
    $region20: #{decoder_block_pallas.1} parent=1 // pred_region
      %s65 = ssub.s32 3072, 3072
      %66 = vsyncadd [#allocation9], %s65
      %s67 = sshll.u32 [#allocation10], 4
      %s68 = int_to_ptr.vmem [resolvable:$true] %s67
      %73 = dma.hbm_to_vmem [thread:$0]  %s4, 3072, %s68, [#allocation9], 768, 768, 48
    $region21: #{decoder_block_pallas.1} parent=1 // pred_fallthru
      _
    // Predicated region
    $region22: #{decoder_block_pallas.1} parent=1 // pred_check
      _
    $region23: #{decoder_block_pallas.1} parent=1 // pred_check_branch
      %75 = sbr.rel (0) target = $region25
    $region24: #{decoder_block_pallas.1} parent=1 // pred_region
      _
    $region25: #{decoder_block_pallas.1} parent=1 // pred_fallthru
      _
    // Predicated region
    $region26: #{decoder_block_pallas.1} parent=1 // pred_check
      _
    $region27: #{decoder_block_pallas.1} parent=1 // pred_check_branch
      %77 = sbr.rel (0) target = $region29
    $region28: #{decoder_block_pallas.1} parent=1 // pred_region
      _
    $region29: #{decoder_block_pallas.1} parent=1 // pred_fallthru
      _
    // Predicated region
    $region30: #{decoder_block_pallas.1} parent=1 // pred_check
      _
    $region31: #{decoder_block_pallas.1} parent=1 // pred_check_branch
      %79 = sbr.rel (0) target = $region33
    $region32: #{decoder_block_pallas.1} parent=1 // pred_region
      %80 = dma.done [#allocation3], 256
    $region33: #{decoder_block_pallas.1} parent=1 // pred_fallthru
      _
    // Predicated region
    $region34: #{decoder_block_pallas.1} parent=1 // pred_check
      _
    $region35: #{decoder_block_pallas.1} parent=1 // pred_check_branch
      %82 = sbr.rel (0) target = $region37
    $region36: #{decoder_block_pallas.1} parent=1 // pred_region
      %83 = dma.done [#allocation6], 256
    $region37: #{decoder_block_pallas.1} parent=1 // pred_fallthru
      _
    // Predicated region
    $region38: #{decoder_block_pallas.1} parent=1 // pred_check
      _
    $region39: #{decoder_block_pallas.1} parent=1 // pred_check_branch
      %85 = sbr.rel (0) target = $region41
    $region40: #{decoder_block_pallas.1} parent=1 // pred_region
      %86 = dma.done [#allocation6], 128
    $region41: #{decoder_block_pallas.1} parent=1 // pred_fallthru
      _
    // Predicated region
    $region42: #{decoder_block_pallas.1} parent=1 // pred_check
      _
    $region43: #{decoder_block_pallas.1} parent=1 // pred_check_branch
      %88 = sbr.rel (0) target = $region45
    $region44: #{decoder_block_pallas.1} parent=1 // pred_region
      %89 = dma.done [#allocation9], 256
    $region45: #{decoder_block_pallas.1} parent=1 // pred_fallthru
      _
    // Predicated region
    $region46: #{decoder_block_pallas.1} parent=1 // pred_check
      _
    $region47: #{decoder_block_pallas.1} parent=1 // pred_check_branch
      %91 = sbr.rel (0) target = $region49
    $region48: #{decoder_block_pallas.1} parent=1 // pred_region
      %92 = dma.done [#allocation9], 3072
    $region49: #{decoder_block_pallas.1} parent=1 // pred_fallthru
      _
    %v93 = vld [vmem:[#allocation2] sm:$0xff]
    %v94 = vld [vmem:[#allocation2 + $0x8] sm:$0xff]
    %v95 = vld [vmem:[#allocation7] sm:$0xff]
    %v96 = vadd.f32 %v93, %v95
    %v97 = vadd.f32 %v94, %v95
    %v98 = vld [vmem:[#allocation5] sm:$0xff]
    %v99 = vld [vmem:[#allocation5 + $0x8] sm:$0xff]
    %v100 = vld [vmem:[#allocation8] sm:$0xff]
    %v101 = vld [vmem:[#allocation8 + $0x8] sm:$0xff]
    %v102 = vld [vmem:[%s6] sm:$0x1]
    %v103 = vld [vmem:[%s6 + $0x1] sm:$0x1]
    %vm104 = vcmask 261120
    %v105 = vsel %vm104, %v96, 0.0
    %106 = vadd.xlane.f32.xlu0 %v105
    %v107 = vpop.xlane.xlu0 %106
    %v108 = vsel %vm104, %v97, 0.0
    %109 = vadd.xlane.f32.xlu0 %v108
    %v110 = vpop.xlane.xlu0 %109
    %v111 = vrcp.pop 32.0
    %v112 = vmul.f32 %v107, %v111
    %v113 = vmul.f32 %v110, %v111
    %v114 = vsub.f32 %v96, %v112
    %v115 = vsub.f32 %v97, %v113
    %v116 = vmul.f32 %v114, %v114
    %v117 = vmul.f32 %v115, %v115
    %v118 = vsel %vm104, %v116, 0.0
    %119 = vadd.xlane.f32.xlu0 %v118
    %v120 = vpop.xlane.xlu0 %119
    %v121 = vsel %vm104, %v117, 0.0
    %122 = vadd.xlane.f32.xlu0 %v121
    %v123 = vpop.xlane.xlu0 %122
    %v124 = vmul.f32 %v120, %v111
    %v125 = vmul.f32 %v123, %v111
    %v126 = vadd.f32 %v124, 1e-05
    %v127 = vadd.f32 %v125, 1e-05
    %v128 = vrsqrt.pop %v126
    %v129 = vrsqrt.pop %v127
    %v130 = vmul.f32 %v114, %v128
    %v131 = vmul.f32 %v115, %v129
    %v132 = vlaneseq
    %v133 = vshrl.u32 %v132, 7
    %v134 = vsub.s32 0, %v133
    %v135 = vrot.slane %v102, %v134
    %v136 = vmul.f32 %v130, %v135
    %v137 = vmul.f32 %v131, %v135
    %v138 = vlaneseq
    %v139 = vshrl.u32 %v138, 7
    %v140 = vsub.s32 0, %v139
    %v141 = vrot.slane %v103, %v140
    %v142 = vadd.f32 %v136, %v141
    %v143 = vadd.f32 %v137, %v141
    %v144 = vld [vmem:[#allocation10] sm:$0xff]
    %v145 = vld [vmem:[#allocation10 + $0x30] sm:$0xff]
    %v146 = vld [vmem:[#allocation10 + $0x60] sm:$0xff]
    %v147 = vld [vmem:[#allocation10 + $0x90] sm:$0xff]
    %v148 = vld [vmem:[%s5] sm:$0x1]
    %v150 = vlaneseq
    %v151 = vshrl.u32 %v150, 7
    %v152 = vsub.s32 0, %v151
    %v153 = vrot.slane %v148, %v152
    %v156 = vsel %vm104, %v142, 0
    %v159 = vsel %vm104, %v143, 0
    %161 = vmatprep.subr.mxu0 0.0
    %162 = vmatpush1.msra.mxu0 0.0
    %163 = vmatprep.subr.mxu0 0.0
    %164 = vmatpush1.msra.mxu0 0.0
    %165 = vmatprep.subr.mxu0 0.0
    %166 = vmatpush1.msra.mxu0 0.0
    %167 = vmatprep.subr.mxu0 0.0
    %168 = vmatpush1.msra.mxu0 0.0
    %169 = vmatprep.subr.mxu0 0.0
    %170 = vmatpush1.msra.mxu0 0.0
    %171 = vmatprep.subr.mxu0 0.0
    %172 = vmatpush1.msra.mxu0 0.0
    %173 = vmatprep.subr.mxu0 0.0
    %174 = vmatpush1.msra.mxu0 0.0
    %175 = vmatprep.subr.mxu0 0.0
    %176 = vmatpush1.msra.mxu0 0.0
    %177 = vmatprep.subr.mxu0 0.0
    %178 = vmatpush1.msra.mxu0 0.0
    %179 = vmatprep.subr.mxu0 0.0
    %180 = vmatpush1.msra.mxu0 0.0
    %181 = vmatprep.subr.mxu0 0.0
    %182 = vmatpush1.msra.mxu0 0.0
    %183 = vmatprep.subr.mxu0 0.0
    %184 = vmatpush1.msra.mxu0 0.0
    %185 = vmatprep.subr.mxu0 0.0
    %186 = vmatpush1.msra.mxu0 %v147
    %187 = vmatprep.subr.mxu0 0.0
    %188 = vmatpush1.msra.mxu0 %v146
    %189 = vmatprep.subr.mxu0 0.0
    %190 = vmatpush1.msra.mxu0 %v145
    %191 = vmatprep.subr.mxu0 0.0
    %192 = vmatpush1.msra.mxu0 %v144
    %193 = vmatprep.subr.mxu0 0.0
    %194 = vmatpush2.msra.mxu0 0.0
    %195 = vmatprep.subr.mxu0 0.0
    %196 = vmatpush2.msra.mxu0 0.0
    %197 = vmatprep.subr.mxu0 0.0
    %198 = vmatpush2.msra.mxu0 0.0
    %199 = vmatprep.subr.mxu0 0.0
    %200 = vmatpush2.msra.mxu0 0.0
    %201 = vmatprep.subr.mxu0 0.0
    %202 = vmatpush2.msra.mxu0 0.0
    %203 = vmatprep.subr.mxu0 0.0
    %204 = vmatpush2.msra.mxu0 0.0
    %205 = vmatprep.subr.mxu0 0.0
    %206 = vmatpush2.msra.mxu0 0.0
    %207 = vmatprep.subr.mxu0 0.0
    %208 = vmatpush2.msra.mxu0 0.0
    %209 = vmatprep.subr.mxu0 0.0
    %210 = vmatpush2.msra.mxu0 0.0
    %211 = vmatprep.subr.mxu0 0.0
    %212 = vmatpush2.msra.mxu0 0.0
    %213 = vmatprep.subr.mxu0 0.0
    %214 = vmatpush2.msra.mxu0 0.0
    %215 = vmatprep.subr.mxu0 0.0
    %216 = vmatpush2.msra.mxu0 0.0
    %217 = vmatprep.subr.mxu0 0.0
    %218 = vmatpush2.msra.mxu0 0.0
    %219 = vmatprep.subr.mxu0 0.0
    %220 = vmatpush2.msra.mxu0 0.0
    %221 = vmatprep.subr.mxu0 0.0
    %222 = vmatpush2.msra.mxu0 0.0
    %223 = vmatprep.subr.mxu0 0.0
    %224 = vmatpush2.msra.mxu0 0.0
    %225 = vmatprep.mubr.f32.mxu0 0.0
    %226 = vmatmul.mubr.f32.gmra.mxu0 %v156
    %v227 = vpop.f32.mrf.mxu0
    %v228 = vadd.f32 %v153, %v227
    %v229 = vpop.f32.mrf.mxu0
    %230 = vmatprep.mubr.f32.mxu0 0.0
    %231 = vmatmul.mubr.f32.gmra.mxu0 %v159
    %v232 = vpop.f32.mrf.mxu0
    %v233 = vadd.f32 %v153, %v232
    %v234 = vpop.f32.mrf.mxu0
    %235 = vdwg.mxu0
    %238 = vrot.lane.b32.xlu0 %v228, 120
    %v239 = vpop.permute.xlu0 %238
    %240 = vrot.lane.b32.xlu0 %v233, 120
    %v241 = vpop.permute.xlu0 %240
    %244 = vrot.lane.b32.xlu0 %v228, 112
    %v245 = vpop.permute.xlu0 %244
    %246 = vrot.lane.b32.xlu0 %v233, 112
    %v247 = vpop.permute.xlu0 %246
    %250 = vrot.lane.b32.xlu0 %v228, 104
    %v251 = vpop.permute.xlu0 %250
    %252 = vrot.lane.b32.xlu0 %v233, 104
    %v253 = vpop.permute.xlu0 %252
    %v256 = vmul.f32 %v228, 0.35355338
    %v257 = vmul.f32 %v233, 0.35355338
    %v258 = vmul.f32 %v239, 0.35355338
    %v259 = vmul.f32 %v241, 0.35355338
    %v260 = vmul.f32 %v245, 0.35355338
    %v261 = vmul.f32 %v247, 0.35355338
    %v262 = vmul.f32 %v251, 0.35355338
    %v263 = vmul.f32 %v253, 0.35355338
    %264 = vrot.lane.b32.xlu0 %v228, 96
    %v265 = vpop.permute.xlu0 %264
    %266 = vrot.lane.b32.xlu0 %v233, 96
    %v267 = vpop.permute.xlu0 %266
    %vm268 = vcmask 64512
    %v270 = vsel %vm268, %v256, 0
    %v273 = vsel %vm268, %v257, 0
    %v275 = vsel %vm268, %v265, 0
    %v277 = vsel %vm268, %v267, 0
    %279 = vmatprep.subr.mxu0 0.0
    %280 = vmatpush1.xpose.msra.mxu0 0.0
    %281 = vmatprep.subr.mxu0 0.0
    %282 = vmatpush1.xpose.msra.mxu0 0.0
    %283 = vmatprep.subr.mxu0 0.0
    %284 = vmatpush1.xpose.msra.mxu0 0.0
    %285 = vmatprep.subr.mxu0 0.0
    %286 = vmatpush1.xpose.msra.mxu0 0.0
    %287 = vmatprep.subr.mxu0 0.0
    %288 = vmatpush1.xpose.msra.mxu0 0.0
    %289 = vmatprep.subr.mxu0 0.0
    %290 = vmatpush1.xpose.msra.mxu0 0.0
    %291 = vmatprep.subr.mxu0 0.0
    %292 = vmatpush1.xpose.msra.mxu0 0.0
    %293 = vmatprep.subr.mxu0 0.0
    %294 = vmatpush1.xpose.msra.mxu0 0.0
    %295 = vmatprep.subr.mxu0 0.0
    %296 = vmatpush1.xpose.msra.mxu0 0.0
    %297 = vmatprep.subr.mxu0 0.0
    %298 = vmatpush1.xpose.msra.mxu0 0.0
    %299 = vmatprep.subr.mxu0 0.0
    %300 = vmatpush1.xpose.msra.mxu0 0.0
    %301 = vmatprep.subr.mxu0 0.0
    %302 = vmatpush1.xpose.msra.mxu0 0.0
    %303 = vmatprep.subr.mxu0 0.0
    %304 = vmatpush1.xpose.msra.mxu0 0.0
    %305 = vmatprep.subr.mxu0 0.0
    %306 = vmatpush1.xpose.msra.mxu0 0.0
    %307 = vmatprep.subr.mxu0 0.0
    %308 = vmatpush1.xpose.msra.mxu0 %v277
    %309 = vmatprep.subr.mxu0 0.0
    %310 = vmatpush1.xpose.msra.mxu0 %v275
    %311 = vmatprep.subr.mxu0 0.0
    %312 = vmatpush2.xpose.msra.mxu0 0.0
    %313 = vmatprep.subr.mxu0 0.0
    %314 = vmatpush2.xpose.msra.mxu0 0.0
    %315 = vmatprep.subr.mxu0 0.0
    %316 = vmatpush2.xpose.msra.mxu0 0.0
    %317 = vmatprep.subr.mxu0 0.0
    %318 = vmatpush2.xpose.msra.mxu0 0.0
    %319 = vmatprep.subr.mxu0 0.0
    %320 = vmatpush2.xpose.msra.mxu0 0.0
    %321 = vmatprep.subr.mxu0 0.0
    %322 = vmatpush2.xpose.msra.mxu0 0.0
    %323 = vmatprep.subr.mxu0 0.0
    %324 = vmatpush2.xpose.msra.mxu0 0.0
    %325 = vmatprep.subr.mxu0 0.0
    %326 = vmatpush2.xpose.msra.mxu0 0.0
    %327 = vmatprep.subr.mxu0 0.0
    %328 = vmatpush2.xpose.msra.mxu0 0.0
    %329 = vmatprep.subr.mxu0 0.0
    %330 = vmatpush2.xpose.msra.mxu0 0.0
    %331 = vmatprep.subr.mxu0 0.0
    %332 = vmatpush2.xpose.msra.mxu0 0.0
    %333 = vmatprep.subr.mxu0 0.0
    %334 = vmatpush2.xpose.msra.mxu0 0.0
    %335 = vmatprep.subr.mxu0 0.0
    %336 = vmatpush2.xpose.msra.mxu0 0.0
    %337 = vmatprep.subr.mxu0 0.0
    %338 = vmatpush2.xpose.msra.mxu0 0.0
    %339 = vmatprep.subr.mxu0 0.0
    %340 = vmatpush2.xpose.msra.mxu0 0.0
    %341 = vmatprep.subr.mxu0 0.0
    %342 = vmatpush2.xpose.msra.mxu0 0.0
    %343 = vmatprep.mubr.f32.mxu0 0.0
    %344 = vmatmul.mubr.f32.gmra.mxu0 %v270
    %v345 = vpop.f32.mrf.mxu0
    %v346 = vadd.f32 %v100, %v345
    %v347 = vpop.f32.mrf.mxu0
    %348 = vmatprep.mubr.f32.mxu0 0.0
    %349 = vmatmul.mubr.f32.gmra.mxu0 %v273
    %v350 = vpop.f32.mrf.mxu0
    %v351 = vadd.f32 %v101, %v350
    %v352 = vpop.f32.mrf.mxu0
    %353 = vdwg.mxu0
    %354 = vrot.lane.b32.xlu0 %v239, 96
    %v355 = vpop.permute.xlu0 %354
    %356 = vrot.lane.b32.xlu0 %v241, 96
    %v357 = vpop.permute.xlu0 %356
    %v359 = vsel %vm268, %v258, 0
    %v362 = vsel %vm268, %v259, 0
    %v364 = vsel %vm268, %v355, 0
    %v366 = vsel %vm268, %v357, 0
    %368 = vmatprep.subr.mxu0 0.0
    %369 = vmatpush1.xpose.msra.mxu0 0.0
    %370 = vmatprep.subr.mxu0 0.0
    %371 = vmatpush1.xpose.msra.mxu0 0.0
    %372 = vmatprep.subr.mxu0 0.0
    %373 = vmatpush1.xpose.msra.mxu0 0.0
    %374 = vmatprep.subr.mxu0 0.0
    %375 = vmatpush1.xpose.msra.mxu0 0.0
    %376 = vmatprep.subr.mxu0 0.0
    %377 = vmatpush1.xpose.msra.mxu0 0.0
    %378 = vmatprep.subr.mxu0 0.0
    %379 = vmatpush1.xpose.msra.mxu0 0.0
    %380 = vmatprep.subr.mxu0 0.0
    %381 = vmatpush1.xpose.msra.mxu0 0.0
    %382 = vmatprep.subr.mxu0 0.0
    %383 = vmatpush1.xpose.msra.mxu0 0.0
    %384 = vmatprep.subr.mxu0 0.0
    %385 = vmatpush1.xpose.msra.mxu0 0.0
    %386 = vmatprep.subr.mxu0 0.0
    %387 = vmatpush1.xpose.msra.mxu0 0.0
    %388 = vmatprep.subr.mxu0 0.0
    %389 = vmatpush1.xpose.msra.mxu0 0.0
    %390 = vmatprep.subr.mxu0 0.0
    %391 = vmatpush1.xpose.msra.mxu0 0.0
    %392 = vmatprep.subr.mxu0 0.0
    %393 = vmatpush1.xpose.msra.mxu0 0.0
    %394 = vmatprep.subr.mxu0 0.0
    %395 = vmatpush1.xpose.msra.mxu0 0.0
    %396 = vmatprep.subr.mxu0 0.0
    %397 = vmatpush1.xpose.msra.mxu0 %v366
    %398 = vmatprep.subr.mxu0 0.0
    %399 = vmatpush1.xpose.msra.mxu0 %v364
    %400 = vmatprep.subr.mxu0 0.0
    %401 = vmatpush2.xpose.msra.mxu0 0.0
    %402 = vmatprep.subr.mxu0 0.0
    %403 = vmatpush2.xpose.msra.mxu0 0.0
    %404 = vmatprep.subr.mxu0 0.0
    %405 = vmatpush2.xpose.msra.mxu0 0.0
    %406 = vmatprep.subr.mxu0 0.0
    %407 = vmatpush2.xpose.msra.mxu0 0.0
    %408 = vmatprep.subr.mxu0 0.0
    %409 = vmatpush2.xpose.msra.mxu0 0.0
    %410 = vmatprep.subr.mxu0 0.0
    %411 = vmatpush2.xpose.msra.mxu0 0.0
    %412 = vmatprep.subr.mxu0 0.0
    %413 = vmatpush2.xpose.msra.mxu0 0.0
    %414 = vmatprep.subr.mxu0 0.0
    %415 = vmatpush2.xpose.msra.mxu0 0.0
    %416 = vmatprep.subr.mxu0 0.0
    %417 = vmatpush2.xpose.msra.mxu0 0.0
    %418 = vmatprep.subr.mxu0 0.0
    %419 = vmatpush2.xpose.msra.mxu0 0.0
    %420 = vmatprep.subr.mxu0 0.0
    %421 = vmatpush2.xpose.msra.mxu0 0.0
    %422 = vmatprep.subr.mxu0 0.0
    %423 = vmatpush2.xpose.msra.mxu0 0.0
    %424 = vmatprep.subr.mxu0 0.0
    %425 = vmatpush2.xpose.msra.mxu0 0.0
    %426 = vmatprep.subr.mxu0 0.0
    %427 = vmatpush2.xpose.msra.mxu0 0.0
    %428 = vmatprep.subr.mxu0 0.0
    %429 = vmatpush2.xpose.msra.mxu0 0.0
    %430 = vmatprep.subr.mxu0 0.0
    %431 = vmatpush2.xpose.msra.mxu0 0.0
    %432 = vmatprep.mubr.f32.mxu0 0.0
    %433 = vmatmul.mubr.f32.gmra.mxu0 %v359
    %v434 = vpop.f32.mrf.mxu0
    %v435 = vadd.f32 %v100, %v434
    %v436 = vpop.f32.mrf.mxu0
    %437 = vmatprep.mubr.f32.mxu0 0.0
    %438 = vmatmul.mubr.f32.gmra.mxu0 %v362
    %v439 = vpop.f32.mrf.mxu0
    %v440 = vadd.f32 %v101, %v439
    %v441 = vpop.f32.mrf.mxu0
    %442 = vdwg.mxu0
    %443 = vrot.lane.b32.xlu0 %v245, 96
    %v444 = vpop.permute.xlu0 %443
    %445 = vrot.lane.b32.xlu0 %v247, 96
    %v446 = vpop.permute.xlu0 %445
    %v448 = vsel %vm268, %v260, 0
    %v451 = vsel %vm268, %v261, 0
    %v453 = vsel %vm268, %v444, 0
    %v455 = vsel %vm268, %v446, 0
    %457 = vmatprep.subr.mxu0 0.0
    %458 = vmatpush1.xpose.msra.mxu0 0.0
    %459 = vmatprep.subr.mxu0 0.0
    %460 = vmatpush1.xpose.msra.mxu0 0.0
    %461 = vmatprep.subr.mxu0 0.0
    %462 = vmatpush1.xpose.msra.mxu0 0.0
    %463 = vmatprep.subr.mxu0 0.0
    %464 = vmatpush1.xpose.msra.mxu0 0.0
    %465 = vmatprep.subr.mxu0 0.0
    %466 = vmatpush1.xpose.msra.mxu0 0.0
    %467 = vmatprep.subr.mxu0 0.0
    %468 = vmatpush1.xpose.msra.mxu0 0.0
    %469 = vmatprep.subr.mxu0 0.0
    %470 = vmatpush1.xpose.msra.mxu0 0.0
    %471 = vmatprep.subr.mxu0 0.0
    %472 = vmatpush1.xpose.msra.mxu0 0.0
    %473 = vmatprep.subr.mxu0 0.0
    %474 = vmatpush1.xpose.msra.mxu0 0.0
    %475 = vmatprep.subr.mxu0 0.0
    %476 = vmatpush1.xpose.msra.mxu0 0.0
    %477 = vmatprep.subr.mxu0 0.0
    %478 = vmatpush1.xpose.msra.mxu0 0.0
    %479 = vmatprep.subr.mxu0 0.0
    %480 = vmatpush1.xpose.msra.mxu0 0.0
    %481 = vmatprep.subr.mxu0 0.0
    %482 = vmatpush1.xpose.msra.mxu0 0.0
    %483 = vmatprep.subr.mxu0 0.0
    %484 = vmatpush1.xpose.msra.mxu0 0.0
    %485 = vmatprep.subr.mxu0 0.0
    %486 = vmatpush1.xpose.msra.mxu0 %v455
    %487 = vmatprep.subr.mxu0 0.0
    %488 = vmatpush1.xpose.msra.mxu0 %v453
    %489 = vmatprep.subr.mxu0 0.0
    %490 = vmatpush2.xpose.msra.mxu0 0.0
    %491 = vmatprep.subr.mxu0 0.0
    %492 = vmatpush2.xpose.msra.mxu0 0.0
    %493 = vmatprep.subr.mxu0 0.0
    %494 = vmatpush2.xpose.msra.mxu0 0.0
    %495 = vmatprep.subr.mxu0 0.0
    %496 = vmatpush2.xpose.msra.mxu0 0.0
    %497 = vmatprep.subr.mxu0 0.0
    %498 = vmatpush2.xpose.msra.mxu0 0.0
    %499 = vmatprep.subr.mxu0 0.0
    %500 = vmatpush2.xpose.msra.mxu0 0.0
    %501 = vmatprep.subr.mxu0 0.0
    %502 = vmatpush2.xpose.msra.mxu0 0.0
    %503 = vmatprep.subr.mxu0 0.0
    %504 = vmatpush2.xpose.msra.mxu0 0.0
    %505 = vmatprep.subr.mxu0 0.0
    %506 = vmatpush2.xpose.msra.mxu0 0.0
    %507 = vmatprep.subr.mxu0 0.0
    %508 = vmatpush2.xpose.msra.mxu0 0.0
    %509 = vmatprep.subr.mxu0 0.0
    %510 = vmatpush2.xpose.msra.mxu0 0.0
    %511 = vmatprep.subr.mxu0 0.0
    %512 = vmatpush2.xpose.msra.mxu0 0.0
    %513 = vmatprep.subr.mxu0 0.0
    %514 = vmatpush2.xpose.msra.mxu0 0.0
    %515 = vmatprep.subr.mxu0 0.0
    %516 = vmatpush2.xpose.msra.mxu0 0.0
    %517 = vmatprep.subr.mxu0 0.0
    %518 = vmatpush2.xpose.msra.mxu0 0.0
    %519 = vmatprep.subr.mxu0 0.0
    %520 = vmatpush2.xpose.msra.mxu0 0.0
    %521 = vmatprep.mubr.f32.mxu0 0.0
    %522 = vmatmul.mubr.f32.gmra.mxu0 %v448
    %v523 = vpop.f32.mrf.mxu0
    %v524 = vadd.f32 %v100, %v523
    %v525 = vpop.f32.mrf.mxu0
    %526 = vmatprep.mubr.f32.mxu0 0.0
    %527 = vmatmul.mubr.f32.gmra.mxu0 %v451
    %v528 = vpop.f32.mrf.mxu0
    %v529 = vadd.f32 %v101, %v528
    %v530 = vpop.f32.mrf.mxu0
    %531 = vdwg.mxu0
    %532 = vrot.lane.b32.xlu0 %v251, 96
    %v533 = vpop.permute.xlu0 %532
    %534 = vrot.lane.b32.xlu0 %v253, 96
    %v535 = vpop.permute.xlu0 %534
    %v537 = vsel %vm268, %v262, 0
    %v540 = vsel %vm268, %v263, 0
    %v542 = vsel %vm268, %v533, 0
    %v544 = vsel %vm268, %v535, 0
    %546 = vmatprep.subr.mxu0 0.0
    %547 = vmatpush1.xpose.msra.mxu0 0.0
    %548 = vmatprep.subr.mxu0 0.0
    %549 = vmatpush1.xpose.msra.mxu0 0.0
    %550 = vmatprep.subr.mxu0 0.0
    %551 = vmatpush1.xpose.msra.mxu0 0.0
    %552 = vmatprep.subr.mxu0 0.0
    %553 = vmatpush1.xpose.msra.mxu0 0.0
    %554 = vmatprep.subr.mxu0 0.0
    %555 = vmatpush1.xpose.msra.mxu0 0.0
    %556 = vmatprep.subr.mxu0 0.0
    %557 = vmatpush1.xpose.msra.mxu0 0.0
    %558 = vmatprep.subr.mxu0 0.0
    %559 = vmatpush1.xpose.msra.mxu0 0.0
    %560 = vmatprep.subr.mxu0 0.0
    %561 = vmatpush1.xpose.msra.mxu0 0.0
    %562 = vmatprep.subr.mxu0 0.0
    %563 = vmatpush1.xpose.msra.mxu0 0.0
    %564 = vmatprep.subr.mxu0 0.0
    %565 = vmatpush1.xpose.msra.mxu0 0.0
    %566 = vmatprep.subr.mxu0 0.0
    %567 = vmatpush1.xpose.msra.mxu0 0.0
    %568 = vmatprep.subr.mxu0 0.0
    %569 = vmatpush1.xpose.msra.mxu0 0.0
    %570 = vmatprep.subr.mxu0 0.0
    %571 = vmatpush1.xpose.msra.mxu0 0.0
    %572 = vmatprep.subr.mxu0 0.0
    %573 = vmatpush1.xpose.msra.mxu0 0.0
    %574 = vmatprep.subr.mxu0 0.0
    %575 = vmatpush1.xpose.msra.mxu0 %v544
    %576 = vmatprep.subr.mxu0 0.0
    %577 = vmatpush1.xpose.msra.mxu0 %v542
    %578 = vmatprep.subr.mxu0 0.0
    %579 = vmatpush2.xpose.msra.mxu0 0.0
    %580 = vmatprep.subr.mxu0 0.0
    %581 = vmatpush2.xpose.msra.mxu0 0.0
    %582 = vmatprep.subr.mxu0 0.0
    %583 = vmatpush2.xpose.msra.mxu0 0.0
    %584 = vmatprep.subr.mxu0 0.0
    %585 = vmatpush2.xpose.msra.mxu0 0.0
    %586 = vmatprep.subr.mxu0 0.0
    %587 = vmatpush2.xpose.msra.mxu0 0.0
    %588 = vmatprep.subr.mxu0 0.0
    %589 = vmatpush2.xpose.msra.mxu0 0.0
    %590 = vmatprep.subr.mxu0 0.0
    %591 = vmatpush2.xpose.msra.mxu0 0.0
    %592 = vmatprep.subr.mxu0 0.0
    %593 = vmatpush2.xpose.msra.mxu0 0.0
    %594 = vmatprep.subr.mxu0 0.0
    %595 = vmatpush2.xpose.msra.mxu0 0.0
    %596 = vmatprep.subr.mxu0 0.0
    %597 = vmatpush2.xpose.msra.mxu0 0.0
    %598 = vmatprep.subr.mxu0 0.0
    %599 = vmatpush2.xpose.msra.mxu0 0.0
    %600 = vmatprep.subr.mxu0 0.0
    %601 = vmatpush2.xpose.msra.mxu0 0.0
    %602 = vmatprep.subr.mxu0 0.0
    %603 = vmatpush2.xpose.msra.mxu0 0.0
    %604 = vmatprep.subr.mxu0 0.0
    %605 = vmatpush2.xpose.msra.mxu0 0.0
    %606 = vmatprep.subr.mxu0 0.0
    %607 = vmatpush2.xpose.msra.mxu0 0.0
    %608 = vmatprep.subr.mxu0 0.0
    %609 = vmatpush2.xpose.msra.mxu0 0.0
    %610 = vmatprep.mubr.f32.mxu0 0.0
    %611 = vmatmul.mubr.f32.gmra.mxu0 %v537
    %v612 = vpop.f32.mrf.mxu0
    %v613 = vadd.f32 %v100, %v612
    %v614 = vpop.f32.mrf.mxu0
    %615 = vmatprep.mubr.f32.mxu0 0.0
    %616 = vmatmul.mubr.f32.gmra.mxu0 %v540
    %v617 = vpop.f32.mrf.mxu0
    %v618 = vadd.f32 %v101, %v617
    %v619 = vpop.f32.mrf.mxu0
    %620 = vdwg.mxu0
    %vm621 = vcmask 130048
    %v622 = vsel %vm621, %v346, -inf
    %623 = vmax.xlane.f32.xlu0 %v622
    %v624 = vpop.xlane.xlu0 %623
    %v625 = vsel %vm621, %v351, -inf
    %626 = vmax.xlane.f32.xlu0 %v625
    %v627 = vpop.xlane.xlu0 %626
    %v628 = vsel %vm621, %v435, -inf
    %629 = vmax.xlane.f32.xlu0 %v628
    %v630 = vpop.xlane.xlu0 %629
    %v631 = vsel %vm621, %v440, -inf
    %632 = vmax.xlane.f32.xlu0 %v631
    %v633 = vpop.xlane.xlu0 %632
    %v634 = vsel %vm621, %v524, -inf
    %635 = vmax.xlane.f32.xlu0 %v634
    %v636 = vpop.xlane.xlu0 %635
    %v637 = vsel %vm621, %v529, -inf
    %638 = vmax.xlane.f32.xlu0 %v637
    %v639 = vpop.xlane.xlu0 %638
    %v640 = vsel %vm621, %v613, -inf
    %641 = vmax.xlane.f32.xlu0 %v640
    %v642 = vpop.xlane.xlu0 %641
    %v643 = vsel %vm621, %v618, -inf
    %644 = vmax.xlane.f32.xlu0 %v643
    %v645 = vpop.xlane.xlu0 %644
    %v646 = vsub.f32 %v346, %v624
    %v647 = vsub.f32 %v351, %v627
    %v648 = vsub.f32 %v435, %v630
    %v649 = vsub.f32 %v440, %v633
    %v650 = vsub.f32 %v524, %v636
    %v651 = vsub.f32 %v529, %v639
    %v652 = vsub.f32 %v613, %v642
    %v653 = vsub.f32 %v618, %v645
    %v654 = vmul.f32 %v646, 1.442695
    %v655 = vpow.pop %v654
    %v656 = vmul.f32 %v647, 1.442695
    %v657 = vpow.pop %v656
    %v658 = vmul.f32 %v648, 1.442695
    %v659 = vpow.pop %v658
    %v660 = vmul.f32 %v649, 1.442695
    %v661 = vpow.pop %v660
    %v662 = vmul.f32 %v650, 1.442695
    %v663 = vpow.pop %v662
    %v664 = vmul.f32 %v651, 1.442695
    %v665 = vpow.pop %v664
    %v666 = vmul.f32 %v652, 1.442695
    %v667 = vpow.pop %v666
    %v668 = vmul.f32 %v653, 1.442695
    %v669 = vpow.pop %v668
    %v670 = vsel %vm621, %v655, 0.0
    %671 = vadd.xlane.f32.xlu0 %v670
    %v672 = vpop.xlane.xlu0 %671
    %v673 = vsel %vm621, %v657, 0.0
    %674 = vadd.xlane.f32.xlu0 %v673
    %v675 = vpop.xlane.xlu0 %674
    %v676 = vsel %vm621, %v659, 0.0
    %677 = vadd.xlane.f32.xlu0 %v676
    %v678 = vpop.xlane.xlu0 %677
    %v679 = vsel %vm621, %v661, 0.0
    %680 = vadd.xlane.f32.xlu0 %v679
    %v681 = vpop.xlane.xlu0 %680
    %v682 = vsel %vm621, %v663, 0.0
    %683 = vadd.xlane.f32.xlu0 %v682
    %v684 = vpop.xlane.xlu0 %683
    %v685 = vsel %vm621, %v665, 0.0
    %686 = vadd.xlane.f32.xlu0 %v685
    %v687 = vpop.xlane.xlu0 %686
    %v688 = vsel %vm621, %v667, 0.0
    %689 = vadd.xlane.f32.xlu0 %v688
    %v690 = vpop.xlane.xlu0 %689
    %v691 = vsel %vm621, %v669, 0.0
    %692 = vadd.xlane.f32.xlu0 %v691
    %v693 = vpop.xlane.xlu0 %692
    %v694 = vrcp.pop %v672
    %v695 = vmul.f32 %v655, %v694
    %v696 = vrcp.pop %v675
    %v697 = vmul.f32 %v657, %v696
    %v698 = vrcp.pop %v678
    %v699 = vmul.f32 %v659, %v698
    %v700 = vrcp.pop %v681
    %v701 = vmul.f32 %v661, %v700
    %v702 = vrcp.pop %v684
    %v703 = vmul.f32 %v663, %v702
    %v704 = vrcp.pop %v687
    %v705 = vmul.f32 %v665, %v704
    %v706 = vrcp.pop %v690
    %v707 = vmul.f32 %v667, %v706
    %v708 = vrcp.pop %v693
    %v709 = vmul.f32 %v669, %v708
    %710 = vrot.lane.b32.xlu0 %v228, 64
    %v711 = vpop.permute.xlu0 %710
    %712 = vrot.lane.b32.xlu0 %v233, 64
    %v713 = vpop.permute.xlu0 %712
    %v717 = vsel %vm621, %v695, 0
    %v720 = vsel %vm621, %v697, 0
    %722 = vmatprep.subr.mxu0 0.0
    %723 = vmatpush1.msra.mxu0 0.0
    %724 = vmatprep.subr.mxu0 0.0
    %725 = vmatpush1.msra.mxu0 0.0
    %726 = vmatprep.subr.mxu0 0.0
    %727 = vmatpush1.msra.mxu0 0.0
    %728 = vmatprep.subr.mxu0 0.0
    %729 = vmatpush1.msra.mxu0 0.0
    %730 = vmatprep.subr.mxu0 0.0
    %731 = vmatpush1.msra.mxu0 0.0
    %732 = vmatprep.subr.mxu0 0.0
    %733 = vmatpush1.msra.mxu0 0.0
    %734 = vmatprep.subr.mxu0 0.0
    %735 = vmatpush1.msra.mxu0 0.0
    %736 = vmatprep.subr.mxu0 0.0
    %737 = vmatpush1.msra.mxu0 0.0
    %738 = vmatprep.subr.mxu0 0.0
    %739 = vmatpush1.msra.mxu0 0.0
    %740 = vmatprep.subr.mxu0 0.0
    %741 = vmatpush1.msra.mxu0 0.0
    %742 = vmatprep.subr.mxu0 0.0
    %743 = vmatpush1.msra.mxu0 0.0
    %744 = vmatprep.subr.mxu0 0.0
    %745 = vmatpush1.msra.mxu0 0.0
    %746 = vmatprep.subr.mxu0 0.0
    %747 = vmatpush1.msra.mxu0 0.0
    %748 = vmatprep.subr.mxu0 0.0
    %749 = vmatpush1.msra.mxu0 0.0
    %750 = vmatprep.subr.mxu0 0.0
    %751 = vmatpush1.msra.mxu0 %v713
    %752 = vmatprep.subr.mxu0 0.0
    %753 = vmatpush1.msra.mxu0 %v711
    %754 = vmatprep.subr.mxu0 0.0
    %755 = vmatpush2.msra.mxu0 0.0
    %756 = vmatprep.subr.mxu0 0.0
    %757 = vmatpush2.msra.mxu0 0.0
    %758 = vmatprep.subr.mxu0 0.0
    %759 = vmatpush2.msra.mxu0 0.0
    %760 = vmatprep.subr.mxu0 0.0
    %761 = vmatpush2.msra.mxu0 0.0
    %762 = vmatprep.subr.mxu0 0.0
    %763 = vmatpush2.msra.mxu0 0.0
    %764 = vmatprep.subr.mxu0 0.0
    %765 = vmatpush2.msra.mxu0 0.0
    %766 = vmatprep.subr.mxu0 0.0
    %767 = vmatpush2.msra.mxu0 0.0
    %768 = vmatprep.subr.mxu0 0.0
    %769 = vmatpush2.msra.mxu0 0.0
    %770 = vmatprep.subr.mxu0 0.0
    %771 = vmatpush2.msra.mxu0 0.0
    %772 = vmatprep.subr.mxu0 0.0
    %773 = vmatpush2.msra.mxu0 0.0
    %774 = vmatprep.subr.mxu0 0.0
    %775 = vmatpush2.msra.mxu0 0.0
    %776 = vmatprep.subr.mxu0 0.0
    %777 = vmatpush2.msra.mxu0 0.0
    %778 = vmatprep.subr.mxu0 0.0
    %779 = vmatpush2.msra.mxu0 0.0
    %780 = vmatprep.subr.mxu0 0.0
    %781 = vmatpush2.msra.mxu0 0.0
    %782 = vmatprep.subr.mxu0 0.0
    %783 = vmatpush2.msra.mxu0 0.0
    %784 = vmatprep.subr.mxu0 0.0
    %785 = vmatpush2.msra.mxu0 0.0
    %786 = vmatprep.mubr.f32.mxu0 0.0
    %787 = vmatmul.mubr.f32.gmra.mxu0 %v717
    %v788 = vpop.f32.mrf.mxu0
    %v789 = vadd.f32 0.0, %v788
    %v790 = vpop.f32.mrf.mxu0
    %791 = vmatprep.mubr.f32.mxu0 0.0
    %792 = vmatmul.mubr.f32.gmra.mxu0 %v720
    %v793 = vpop.f32.mrf.mxu0
    %v794 = vadd.f32 0.0, %v793
    %v795 = vpop.f32.mrf.mxu0
    %796 = vdwg.mxu0
    %797 = vrot.lane.b32.xlu0 %v239, 64
    %v798 = vpop.permute.xlu0 %797
    %799 = vrot.lane.b32.xlu0 %v241, 64
    %v800 = vpop.permute.xlu0 %799
    %v804 = vsel %vm621, %v699, 0
    %v807 = vsel %vm621, %v701, 0
    %809 = vmatprep.subr.mxu0 0.0
    %810 = vmatpush1.msra.mxu0 0.0
    %811 = vmatprep.subr.mxu0 0.0
    %812 = vmatpush1.msra.mxu0 0.0
    %813 = vmatprep.subr.mxu0 0.0
    %814 = vmatpush1.msra.mxu0 0.0
    %815 = vmatprep.subr.mxu0 0.0
    %816 = vmatpush1.msra.mxu0 0.0
    %817 = vmatprep.subr.mxu0 0.0
    %818 = vmatpush1.msra.mxu0 0.0
    %819 = vmatprep.subr.mxu0 0.0
    %820 = vmatpush1.msra.mxu0 0.0
    %821 = vmatprep.subr.mxu0 0.0
    %822 = vmatpush1.msra.mxu0 0.0
    %823 = vmatprep.subr.mxu0 0.0
    %824 = vmatpush1.msra.mxu0 0.0
    %825 = vmatprep.subr.mxu0 0.0
    %826 = vmatpush1.msra.mxu0 0.0
    %827 = vmatprep.subr.mxu0 0.0
    %828 = vmatpush1.msra.mxu0 0.0
    %829 = vmatprep.subr.mxu0 0.0
    %830 = vmatpush1.msra.mxu0 0.0
    %831 = vmatprep.subr.mxu0 0.0
    %832 = vmatpush1.msra.mxu0 0.0
    %833 = vmatprep.subr.mxu0 0.0
    %834 = vmatpush1.msra.mxu0 0.0
    %835 = vmatprep.subr.mxu0 0.0
    %836 = vmatpush1.msra.mxu0 0.0
    %837 = vmatprep.subr.mxu0 0.0
    %838 = vmatpush1.msra.mxu0 %v800
    %839 = vmatprep.subr.mxu0 0.0
    %840 = vmatpush1.msra.mxu0 %v798
    %841 = vmatprep.subr.mxu0 0.0
    %842 = vmatpush2.msra.mxu0 0.0
    %843 = vmatprep.subr.mxu0 0.0
    %844 = vmatpush2.msra.mxu0 0.0
    %845 = vmatprep.subr.mxu0 0.0
    %846 = vmatpush2.msra.mxu0 0.0
    %847 = vmatprep.subr.mxu0 0.0
    %848 = vmatpush2.msra.mxu0 0.0
    %849 = vmatprep.subr.mxu0 0.0
    %850 = vmatpush2.msra.mxu0 0.0
    %851 = vmatprep.subr.mxu0 0.0
    %852 = vmatpush2.msra.mxu0 0.0
    %853 = vmatprep.subr.mxu0 0.0
    %854 = vmatpush2.msra.mxu0 0.0
    %855 = vmatprep.subr.mxu0 0.0
    %856 = vmatpush2.msra.mxu0 0.0
    %857 = vmatprep.subr.mxu0 0.0
    %858 = vmatpush2.msra.mxu0 0.0
    %859 = vmatprep.subr.mxu0 0.0
    %860 = vmatpush2.msra.mxu0 0.0
    %861 = vmatprep.subr.mxu0 0.0
    %862 = vmatpush2.msra.mxu0 0.0
    %863 = vmatprep.subr.mxu0 0.0
    %864 = vmatpush2.msra.mxu0 0.0
    %865 = vmatprep.subr.mxu0 0.0
    %866 = vmatpush2.msra.mxu0 0.0
    %867 = vmatprep.subr.mxu0 0.0
    %868 = vmatpush2.msra.mxu0 0.0
    %869 = vmatprep.subr.mxu0 0.0
    %870 = vmatpush2.msra.mxu0 0.0
    %871 = vmatprep.subr.mxu0 0.0
    %872 = vmatpush2.msra.mxu0 0.0
    %873 = vmatprep.mubr.f32.mxu0 0.0
    %874 = vmatmul.mubr.f32.gmra.mxu0 %v804
    %v875 = vpop.f32.mrf.mxu0
    %v876 = vadd.f32 0.0, %v875
    %v877 = vpop.f32.mrf.mxu0
    %878 = vmatprep.mubr.f32.mxu0 0.0
    %879 = vmatmul.mubr.f32.gmra.mxu0 %v807
    %v880 = vpop.f32.mrf.mxu0
    %v881 = vadd.f32 0.0, %v880
    %v882 = vpop.f32.mrf.mxu0
    %883 = vdwg.mxu0
    %884 = vrot.lane.b32.xlu0 %v245, 64
    %v885 = vpop.permute.xlu0 %884
    %886 = vrot.lane.b32.xlu0 %v247, 64
    %v887 = vpop.permute.xlu0 %886
    %v891 = vsel %vm621, %v703, 0
    %v894 = vsel %vm621, %v705, 0
    %896 = vmatprep.subr.mxu0 0.0
    %897 = vmatpush1.msra.mxu0 0.0
    %898 = vmatprep.subr.mxu0 0.0
    %899 = vmatpush1.msra.mxu0 0.0
    %900 = vmatprep.subr.mxu0 0.0
    %901 = vmatpush1.msra.mxu0 0.0
    %902 = vmatprep.subr.mxu0 0.0
    %903 = vmatpush1.msra.mxu0 0.0
    %904 = vmatprep.subr.mxu0 0.0
    %905 = vmatpush1.msra.mxu0 0.0
    %906 = vmatprep.subr.mxu0 0.0
    %907 = vmatpush1.msra.mxu0 0.0
    %908 = vmatprep.subr.mxu0 0.0
    %909 = vmatpush1.msra.mxu0 0.0
    %910 = vmatprep.subr.mxu0 0.0
    %911 = vmatpush1.msra.mxu0 0.0
    %912 = vmatprep.subr.mxu0 0.0
    %913 = vmatpush1.msra.mxu0 0.0
    %914 = vmatprep.subr.mxu0 0.0
    %915 = vmatpush1.msra.mxu0 0.0
    %916 = vmatprep.subr.mxu0 0.0
    %917 = vmatpush1.msra.mxu0 0.0
    %918 = vmatprep.subr.mxu0 0.0
    %919 = vmatpush1.msra.mxu0 0.0
    %920 = vmatprep.subr.mxu0 0.0
    %921 = vmatpush1.msra.mxu0 0.0
    %922 = vmatprep.subr.mxu0 0.0
    %923 = vmatpush1.msra.mxu0 0.0
    %924 = vmatprep.subr.mxu0 0.0
    %925 = vmatpush1.msra.mxu0 %v887
    %926 = vmatprep.subr.mxu0 0.0
    %927 = vmatpush1.msra.mxu0 %v885
    %928 = vmatprep.subr.mxu0 0.0
    %929 = vmatpush2.msra.mxu0 0.0
    %930 = vmatprep.subr.mxu0 0.0
    %931 = vmatpush2.msra.mxu0 0.0
    %932 = vmatprep.subr.mxu0 0.0
    %933 = vmatpush2.msra.mxu0 0.0
    %934 = vmatprep.subr.mxu0 0.0
    %935 = vmatpush2.msra.mxu0 0.0
    %936 = vmatprep.subr.mxu0 0.0
    %937 = vmatpush2.msra.mxu0 0.0
    %938 = vmatprep.subr.mxu0 0.0
    %939 = vmatpush2.msra.mxu0 0.0
    %940 = vmatprep.subr.mxu0 0.0
    %941 = vmatpush2.msra.mxu0 0.0
    %942 = vmatprep.subr.mxu0 0.0
    %943 = vmatpush2.msra.mxu0 0.0
    %944 = vmatprep.subr.mxu0 0.0
    %945 = vmatpush2.msra.mxu0 0.0
    %946 = vmatprep.subr.mxu0 0.0
    %947 = vmatpush2.msra.mxu0 0.0
    %948 = vmatprep.subr.mxu0 0.0
    %949 = vmatpush2.msra.mxu0 0.0
    %950 = vmatprep.subr.mxu0 0.0
    %951 = vmatpush2.msra.mxu0 0.0
    %952 = vmatprep.subr.mxu0 0.0
    %953 = vmatpush2.msra.mxu0 0.0
    %954 = vmatprep.subr.mxu0 0.0
    %955 = vmatpush2.msra.mxu0 0.0
    %956 = vmatprep.subr.mxu0 0.0
    %957 = vmatpush2.msra.mxu0 0.0
    %958 = vmatprep.subr.mxu0 0.0
    %959 = vmatpush2.msra.mxu0 0.0
    %960 = vmatprep.mubr.f32.mxu0 0.0
    %961 = vmatmul.mubr.f32.gmra.mxu0 %v891
    %v962 = vpop.f32.mrf.mxu0
    %v963 = vadd.f32 0.0, %v962
    %v964 = vpop.f32.mrf.mxu0
    %965 = vmatprep.mubr.f32.mxu0 0.0
    %966 = vmatmul.mubr.f32.gmra.mxu0 %v894
    %v967 = vpop.f32.mrf.mxu0
    %v968 = vadd.f32 0.0, %v967
    %v969 = vpop.f32.mrf.mxu0
    %970 = vdwg.mxu0
    %971 = vrot.lane.b32.xlu0 %v251, 64
    %v972 = vpop.permute.xlu0 %971
    %973 = vrot.lane.b32.xlu0 %v253, 64
    %v974 = vpop.permute.xlu0 %973
    %v978 = vsel %vm621, %v707, 0
    %v981 = vsel %vm621, %v709, 0
    %983 = vmatprep.subr.mxu0 0.0
    %984 = vmatpush1.msra.mxu0 0.0
    %985 = vmatprep.subr.mxu0 0.0
    %986 = vmatpush1.msra.mxu0 0.0
    %987 = vmatprep.subr.mxu0 0.0
    %988 = vmatpush1.msra.mxu0 0.0
    %989 = vmatprep.subr.mxu0 0.0
    %990 = vmatpush1.msra.mxu0 0.0
    %991 = vmatprep.subr.mxu0 0.0
    %992 = vmatpush1.msra.mxu0 0.0
    %993 = vmatprep.subr.mxu0 0.0
    %994 = vmatpush1.msra.mxu0 0.0
    %995 = vmatprep.subr.mxu0 0.0
    %996 = vmatpush1.msra.mxu0 0.0
    %997 = vmatprep.subr.mxu0 0.0
    %998 = vmatpush1.msra.mxu0 0.0
    %999 = vmatprep.subr.mxu0 0.0
    %1000 = vmatpush1.msra.mxu0 0.0
    %1001 = vmatprep.subr.mxu0 0.0
    %1002 = vmatpush1.msra.mxu0 0.0
    %1003 = vmatprep.subr.mxu0 0.0
    %1004 = vmatpush1.msra.mxu0 0.0
    %1005 = vmatprep.subr.mxu0 0.0
    %1006 = vmatpush1.msra.mxu0 0.0
    %1007 = vmatprep.subr.mxu0 0.0
    %1008 = vmatpush1.msra.mxu0 0.0
    %1009 = vmatprep.subr.mxu0 0.0
    %1010 = vmatpush1.msra.mxu0 0.0
    %1011 = vmatprep.subr.mxu0 0.0
    %1012 = vmatpush1.msra.mxu0 %v974
    %1013 = vmatprep.subr.mxu0 0.0
    %1014 = vmatpush1.msra.mxu0 %v972
    %1015 = vmatprep.subr.mxu0 0.0
    %1016 = vmatpush2.msra.mxu0 0.0
    %1017 = vmatprep.subr.mxu0 0.0
    %1018 = vmatpush2.msra.mxu0 0.0
    %1019 = vmatprep.subr.mxu0 0.0
    %1020 = vmatpush2.msra.mxu0 0.0
    %1021 = vmatprep.subr.mxu0 0.0
    %1022 = vmatpush2.msra.mxu0 0.0
    %1023 = vmatprep.subr.mxu0 0.0
    %1024 = vmatpush2.msra.mxu0 0.0
    %1025 = vmatprep.subr.mxu0 0.0
    %1026 = vmatpush2.msra.mxu0 0.0
    %1027 = vmatprep.subr.mxu0 0.0
    %1028 = vmatpush2.msra.mxu0 0.0
    %1029 = vmatprep.subr.mxu0 0.0
    %1030 = vmatpush2.msra.mxu0 0.0
    %1031 = vmatprep.subr.mxu0 0.0
    %1032 = vmatpush2.msra.mxu0 0.0
    %1033 = vmatprep.subr.mxu0 0.0
    %1034 = vmatpush2.msra.mxu0 0.0
    %1035 = vmatprep.subr.mxu0 0.0
    %1036 = vmatpush2.msra.mxu0 0.0
    %1037 = vmatprep.subr.mxu0 0.0
    %1038 = vmatpush2.msra.mxu0 0.0
    %1039 = vmatprep.subr.mxu0 0.0
    %1040 = vmatpush2.msra.mxu0 0.0
    %1041 = vmatprep.subr.mxu0 0.0
    %1042 = vmatpush2.msra.mxu0 0.0
    %1043 = vmatprep.subr.mxu0 0.0
    %1044 = vmatpush2.msra.mxu0 0.0
    %1045 = vmatprep.subr.mxu0 0.0
    %1046 = vmatpush2.msra.mxu0 0.0
    %1047 = vmatprep.mubr.f32.mxu0 0.0
    %1048 = vmatmul.mubr.f32.gmra.mxu0 %v978
    %v1049 = vpop.f32.mrf.mxu0
    %v1050 = vadd.f32 0.0, %v1049
    %v1051 = vpop.f32.mrf.mxu0
    %1052 = vmatprep.mubr.f32.mxu0 0.0
    %1053 = vmatmul.mubr.f32.gmra.mxu0 %v981
    %v1054 = vpop.f32.mrf.mxu0
    %v1055 = vadd.f32 0.0, %v1054
    %v1056 = vpop.f32.mrf.mxu0
    %1057 = vdwg.mxu0
    %1060 = vrot.lane.b32.xlu0 %v876, 8
    %v1061 = vpop.permute.xlu0 %1060
    %1062 = vrot.lane.b32.xlu0 %v881, 8
    %v1063 = vpop.permute.xlu0 %1062
    %1068 = vrot.lane.b32.xlu0 %v963, 16
    %v1069 = vpop.permute.xlu0 %1068
    %1070 = vrot.lane.b32.xlu0 %v968, 16
    %v1071 = vpop.permute.xlu0 %1070
    %1076 = vrot.lane.b32.xlu0 %v1050, 24
    %v1077 = vpop.permute.xlu0 %1076
    %1078 = vrot.lane.b32.xlu0 %v1055, 24
    %v1079 = vpop.permute.xlu0 %1078
    %v1082 = vsel %vm268, %v789, %v1061
    %v1083 = vsel %vm268, %v794, %v1063
    %v1084 = vsel %vm621, %v1082, %v1069
    %v1085 = vsel %vm621, %v1083, %v1071
    %vm1086 = vcmask 195584
    %v1087 = vsel %vm1086, %v1084, %v1077
    %v1088 = vsel %vm1086, %v1085, %v1079
    %v1089 = vld [vmem:[#allocation10 + $0x8] sm:$0xff]
    %v1090 = vld [vmem:[#allocation10 + $0x38] sm:$0xff]
    %v1091 = vld [vmem:[#allocation10 + $0x68] sm:$0xff]
    %v1092 = vld [vmem:[#allocation10 + $0x98] sm:$0xff]
    %v1093 = vld [vmem:[%s5 + $0x1] sm:$0x1]
    %v1095 = vlaneseq
    %v1096 = vshrl.u32 %v1095, 7
    %v1097 = vsub.s32 0, %v1096
    %v1098 = vrot.slane %v1093, %v1097
    %v1101 = vsel %vm104, %v1087, 0
    %v1104 = vsel %vm104, %v1088, 0
    %1106 = vmatprep.subr.mxu0 0.0
    %1107 = vmatpush1.msra.mxu0 0.0
    %1108 = vmatprep.subr.mxu0 0.0
    %1109 = vmatpush1.msra.mxu0 0.0
    %1110 = vmatprep.subr.mxu0 0.0
    %1111 = vmatpush1.msra.mxu0 0.0
    %1112 = vmatprep.subr.mxu0 0.0
    %1113 = vmatpush1.msra.mxu0 0.0
    %1114 = vmatprep.subr.mxu0 0.0
    %1115 = vmatpush1.msra.mxu0 0.0
    %1116 = vmatprep.subr.mxu0 0.0
    %1117 = vmatpush1.msra.mxu0 0.0
    %1118 = vmatprep.subr.mxu0 0.0
    %1119 = vmatpush1.msra.mxu0 0.0
    %1120 = vmatprep.subr.mxu0 0.0
    %1121 = vmatpush1.msra.mxu0 0.0
    %1122 = vmatprep.subr.mxu0 0.0
    %1123 = vmatpush1.msra.mxu0 0.0
    %1124 = vmatprep.subr.mxu0 0.0
    %1125 = vmatpush1.msra.mxu0 0.0
    %1126 = vmatprep.subr.mxu0 0.0
    %1127 = vmatpush1.msra.mxu0 0.0
    %1128 = vmatprep.subr.mxu0 0.0
    %1129 = vmatpush1.msra.mxu0 0.0
    %1130 = vmatprep.subr.mxu0 0.0
    %1131 = vmatpush1.msra.mxu0 %v1092
    %1132 = vmatprep.subr.mxu0 0.0
    %1133 = vmatpush1.msra.mxu0 %v1091
    %1134 = vmatprep.subr.mxu0 0.0
    %1135 = vmatpush1.msra.mxu0 %v1090
    %1136 = vmatprep.subr.mxu0 0.0
    %1137 = vmatpush1.msra.mxu0 %v1089
    %1138 = vmatprep.subr.mxu0 0.0
    %1139 = vmatpush2.msra.mxu0 0.0
    %1140 = vmatprep.subr.mxu0 0.0
    %1141 = vmatpush2.msra.mxu0 0.0
    %1142 = vmatprep.subr.mxu0 0.0
    %1143 = vmatpush2.msra.mxu0 0.0
    %1144 = vmatprep.subr.mxu0 0.0
    %1145 = vmatpush2.msra.mxu0 0.0
    %1146 = vmatprep.subr.mxu0 0.0
    %1147 = vmatpush2.msra.mxu0 0.0
    %1148 = vmatprep.subr.mxu0 0.0
    %1149 = vmatpush2.msra.mxu0 0.0
    %1150 = vmatprep.subr.mxu0 0.0
    %1151 = vmatpush2.msra.mxu0 0.0
    %1152 = vmatprep.subr.mxu0 0.0
    %1153 = vmatpush2.msra.mxu0 0.0
    %1154 = vmatprep.subr.mxu0 0.0
    %1155 = vmatpush2.msra.mxu0 0.0
    %1156 = vmatprep.subr.mxu0 0.0
    %1157 = vmatpush2.msra.mxu0 0.0
    %1158 = vmatprep.subr.mxu0 0.0
    %1159 = vmatpush2.msra.mxu0 0.0
    %1160 = vmatprep.subr.mxu0 0.0
    %1161 = vmatpush2.msra.mxu0 0.0
    %1162 = vmatprep.subr.mxu0 0.0
    %1163 = vmatpush2.msra.mxu0 0.0
    %1164 = vmatprep.subr.mxu0 0.0
    %1165 = vmatpush2.msra.mxu0 0.0
    %1166 = vmatprep.subr.mxu0 0.0
    %1167 = vmatpush2.msra.mxu0 0.0
    %1168 = vmatprep.subr.mxu0 0.0
    %1169 = vmatpush2.msra.mxu0 0.0
    %1170 = vmatprep.mubr.f32.mxu0 0.0
    %1171 = vmatmul.mubr.f32.gmra.mxu0 %v1101
    %v1172 = vpop.f32.mrf.mxu0
    %v1173 = vadd.f32 %v1098, %v1172
    %v1174 = vpop.f32.mrf.mxu0
    %1175 = vmatprep.mubr.f32.mxu0 0.0
    %1176 = vmatmul.mubr.f32.gmra.mxu0 %v1104
    %v1177 = vpop.f32.mrf.mxu0
    %v1178 = vadd.f32 %v1098, %v1177
    %v1179 = vpop.f32.mrf.mxu0
    %1180 = vdwg.mxu0
    %v1181 = vadd.f32 %v142, %v1173
    %v1182 = vadd.f32 %v143, %v1178
    %v1183 = vld [vmem:[%s6 + $0x2] sm:$0x1]
    %v1184 = vld [vmem:[%s6 + $0x3] sm:$0x1]
    %v1185 = vsel %vm104, %v98, 0.0
    %1186 = vadd.xlane.f32.xlu0 %v1185
    %v1187 = vpop.xlane.xlu0 %1186
    %v1188 = vsel %vm104, %v99, 0.0
    %1189 = vadd.xlane.f32.xlu0 %v1188
    %v1190 = vpop.xlane.xlu0 %1189
    %v1191 = vmul.f32 %v1187, %v111
    %v1192 = vmul.f32 %v1190, %v111
    %v1193 = vsub.f32 %v98, %v1191
    %v1194 = vsub.f32 %v99, %v1192
    %v1195 = vmul.f32 %v1193, %v1193
    %v1196 = vmul.f32 %v1194, %v1194
    %v1197 = vsel %vm104, %v1195, 0.0
    %1198 = vadd.xlane.f32.xlu0 %v1197
    %v1199 = vpop.xlane.xlu0 %1198
    %v1200 = vsel %vm104, %v1196, 0.0
    %1201 = vadd.xlane.f32.xlu0 %v1200
    %v1202 = vpop.xlane.xlu0 %1201
    %v1203 = vmul.f32 %v1199, %v111
    %v1204 = vmul.f32 %v1202, %v111
    %v1205 = vadd.f32 %v1203, 1e-05
    %v1206 = vadd.f32 %v1204, 1e-05
    %v1207 = vrsqrt.pop %v1205
    %v1208 = vrsqrt.pop %v1206
    %v1209 = vmul.f32 %v1193, %v1207
    %v1210 = vmul.f32 %v1194, %v1208
    %v1211 = vlaneseq
    %v1212 = vshrl.u32 %v1211, 7
    %v1213 = vsub.s32 0, %v1212
    %v1214 = vrot.slane %v1183, %v1213
    %v1215 = vmul.f32 %v1209, %v1214
    %v1216 = vmul.f32 %v1210, %v1214
    %v1217 = vlaneseq
    %v1218 = vshrl.u32 %v1217, 7
    %v1219 = vsub.s32 0, %v1218
    %v1220 = vrot.slane %v1184, %v1219
    %v1221 = vadd.f32 %v1215, %v1220
    %v1222 = vadd.f32 %v1216, %v1220
    %v1223 = vld [vmem:[#allocation10 + $0x10] sm:$0xff]
    %v1224 = vld [vmem:[#allocation10 + $0x40] sm:$0xff]
    %v1225 = vld [vmem:[#allocation10 + $0x70] sm:$0xff]
    %v1226 = vld [vmem:[#allocation10 + $0xa0] sm:$0xff]
    %v1227 = vld [vmem:[%s5 + $0x2] sm:$0x1]
    %v1229 = vlaneseq
    %v1230 = vshrl.u32 %v1229, 7
    %v1231 = vsub.s32 0, %v1230
    %v1232 = vrot.slane %v1227, %v1231
    %v1235 = vsel %vm104, %v1181, 0
    %v1238 = vsel %vm104, %v1182, 0
    %1240 = vmatprep.subr.mxu0 0.0
    %1241 = vmatpush1.msra.mxu0 0.0
    %1242 = vmatprep.subr.mxu0 0.0
    %1243 = vmatpush1.msra.mxu0 0.0
    %1244 = vmatprep.subr.mxu0 0.0
    %1245 = vmatpush1.msra.mxu0 0.0
    %1246 = vmatprep.subr.mxu0 0.0
    %1247 = vmatpush1.msra.mxu0 0.0
    %1248 = vmatprep.subr.mxu0 0.0
    %1249 = vmatpush1.msra.mxu0 0.0
    %1250 = vmatprep.subr.mxu0 0.0
    %1251 = vmatpush1.msra.mxu0 0.0
    %1252 = vmatprep.subr.mxu0 0.0
    %1253 = vmatpush1.msra.mxu0 0.0
    %1254 = vmatprep.subr.mxu0 0.0
    %1255 = vmatpush1.msra.mxu0 0.0
    %1256 = vmatprep.subr.mxu0 0.0
    %1257 = vmatpush1.msra.mxu0 0.0
    %1258 = vmatprep.subr.mxu0 0.0
    %1259 = vmatpush1.msra.mxu0 0.0
    %1260 = vmatprep.subr.mxu0 0.0
    %1261 = vmatpush1.msra.mxu0 0.0
    %1262 = vmatprep.subr.mxu0 0.0
    %1263 = vmatpush1.msra.mxu0 0.0
    %1264 = vmatprep.subr.mxu0 0.0
    %1265 = vmatpush1.msra.mxu0 %v1226
    %1266 = vmatprep.subr.mxu0 0.0
    %1267 = vmatpush1.msra.mxu0 %v1225
    %1268 = vmatprep.subr.mxu0 0.0
    %1269 = vmatpush1.msra.mxu0 %v1224
    %1270 = vmatprep.subr.mxu0 0.0
    %1271 = vmatpush1.msra.mxu0 %v1223
    %1272 = vmatprep.subr.mxu0 0.0
    %1273 = vmatpush2.msra.mxu0 0.0
    %1274 = vmatprep.subr.mxu0 0.0
    %1275 = vmatpush2.msra.mxu0 0.0
    %1276 = vmatprep.subr.mxu0 0.0
    %1277 = vmatpush2.msra.mxu0 0.0
    %1278 = vmatprep.subr.mxu0 0.0
    %1279 = vmatpush2.msra.mxu0 0.0
    %1280 = vmatprep.subr.mxu0 0.0
    %1281 = vmatpush2.msra.mxu0 0.0
    %1282 = vmatprep.subr.mxu0 0.0
    %1283 = vmatpush2.msra.mxu0 0.0
    %1284 = vmatprep.subr.mxu0 0.0
    %1285 = vmatpush2.msra.mxu0 0.0
    %1286 = vmatprep.subr.mxu0 0.0
    %1287 = vmatpush2.msra.mxu0 0.0
    %1288 = vmatprep.subr.mxu0 0.0
    %1289 = vmatpush2.msra.mxu0 0.0
    %1290 = vmatprep.subr.mxu0 0.0
    %1291 = vmatpush2.msra.mxu0 0.0
    %1292 = vmatprep.subr.mxu0 0.0
    %1293 = vmatpush2.msra.mxu0 0.0
    %1294 = vmatprep.subr.mxu0 0.0
    %1295 = vmatpush2.msra.mxu0 0.0
    %1296 = vmatprep.subr.mxu0 0.0
    %1297 = vmatpush2.msra.mxu0 0.0
    %1298 = vmatprep.subr.mxu0 0.0
    %1299 = vmatpush2.msra.mxu0 0.0
    %1300 = vmatprep.subr.mxu0 0.0
    %1301 = vmatpush2.msra.mxu0 0.0
    %1302 = vmatprep.subr.mxu0 0.0
    %1303 = vmatpush2.msra.mxu0 0.0
    %1304 = vmatprep.mubr.f32.mxu0 0.0
    %1305 = vmatmul.mubr.f32.gmra.mxu0 %v1235
    %v1306 = vpop.f32.mrf.mxu0
    %v1307 = vadd.f32 %v1232, %v1306
    %v1308 = vpop.f32.mrf.mxu0
    %1309 = vmatprep.mubr.f32.mxu0 0.0
    %1310 = vmatmul.mubr.f32.gmra.mxu0 %v1238
    %v1311 = vpop.f32.mrf.mxu0
    %v1312 = vadd.f32 %v1232, %v1311
    %v1313 = vpop.f32.mrf.mxu0
    %1314 = vdwg.mxu0
    %1319 = vrot.lane.b32.xlu0 %v1223, 96
    %v1320 = vpop.permute.xlu0 %1319
    %1321 = vrot.lane.b32.xlu0 %v1224, 96
    %v1322 = vpop.permute.xlu0 %1321
    %1323 = vrot.lane.b32.xlu0 %v1225, 96
    %v1324 = vpop.permute.xlu0 %1323
    %1325 = vrot.lane.b32.xlu0 %v1226, 96
    %v1326 = vpop.permute.xlu0 %1325
    %1331 = vrot.lane.b32.xlu0 %v1232, 96
    %v1332 = vpop.permute.xlu0 %1331
    %v1335 = vsel %vm104, %v1221, 0
    %v1338 = vsel %vm104, %v1222, 0
    %1340 = vmatprep.subr.mxu0 0.0
    %1341 = vmatpush1.msra.mxu0 0.0
    %1342 = vmatprep.subr.mxu0 0.0
    %1343 = vmatpush1.msra.mxu0 0.0
    %1344 = vmatprep.subr.mxu0 0.0
    %1345 = vmatpush1.msra.mxu0 0.0
    %1346 = vmatprep.subr.mxu0 0.0
    %1347 = vmatpush1.msra.mxu0 0.0
    %1348 = vmatprep.subr.mxu0 0.0
    %1349 = vmatpush1.msra.mxu0 0.0
    %1350 = vmatprep.subr.mxu0 0.0
    %1351 = vmatpush1.msra.mxu0 0.0
    %1352 = vmatprep.subr.mxu0 0.0
    %1353 = vmatpush1.msra.mxu0 0.0
    %1354 = vmatprep.subr.mxu0 0.0
    %1355 = vmatpush1.msra.mxu0 0.0
    %1356 = vmatprep.subr.mxu0 0.0
    %1357 = vmatpush1.msra.mxu0 0.0
    %1358 = vmatprep.subr.mxu0 0.0
    %1359 = vmatpush1.msra.mxu0 0.0
    %1360 = vmatprep.subr.mxu0 0.0
    %1361 = vmatpush1.msra.mxu0 0.0
    %1362 = vmatprep.subr.mxu0 0.0
    %1363 = vmatpush1.msra.mxu0 0.0
    %1364 = vmatprep.subr.mxu0 0.0
    %1365 = vmatpush1.msra.mxu0 %v1326
    %1366 = vmatprep.subr.mxu0 0.0
    %1367 = vmatpush1.msra.mxu0 %v1324
    %1368 = vmatprep.subr.mxu0 0.0
    %1369 = vmatpush1.msra.mxu0 %v1322
    %1370 = vmatprep.subr.mxu0 0.0
    %1371 = vmatpush1.msra.mxu0 %v1320
    %1372 = vmatprep.subr.mxu0 0.0
    %1373 = vmatpush2.msra.mxu0 0.0
    %1374 = vmatprep.subr.mxu0 0.0
    %1375 = vmatpush2.msra.mxu0 0.0
    %1376 = vmatprep.subr.mxu0 0.0
    %1377 = vmatpush2.msra.mxu0 0.0
    %1378 = vmatprep.subr.mxu0 0.0
    %1379 = vmatpush2.msra.mxu0 0.0
    %1380 = vmatprep.subr.mxu0 0.0
    %1381 = vmatpush2.msra.mxu0 0.0
    %1382 = vmatprep.subr.mxu0 0.0
    %1383 = vmatpush2.msra.mxu0 0.0
    %1384 = vmatprep.subr.mxu0 0.0
    %1385 = vmatpush2.msra.mxu0 0.0
    %1386 = vmatprep.subr.mxu0 0.0
    %1387 = vmatpush2.msra.mxu0 0.0
    %1388 = vmatprep.subr.mxu0 0.0
    %1389 = vmatpush2.msra.mxu0 0.0
    %1390 = vmatprep.subr.mxu0 0.0
    %1391 = vmatpush2.msra.mxu0 0.0
    %1392 = vmatprep.subr.mxu0 0.0
    %1393 = vmatpush2.msra.mxu0 0.0
    %1394 = vmatprep.subr.mxu0 0.0
    %1395 = vmatpush2.msra.mxu0 0.0
    %1396 = vmatprep.subr.mxu0 0.0
    %1397 = vmatpush2.msra.mxu0 0.0
    %1398 = vmatprep.subr.mxu0 0.0
    %1399 = vmatpush2.msra.mxu0 0.0
    %1400 = vmatprep.subr.mxu0 0.0
    %1401 = vmatpush2.msra.mxu0 0.0
    %1402 = vmatprep.subr.mxu0 0.0
    %1403 = vmatpush2.msra.mxu0 0.0
    %1404 = vmatprep.mubr.f32.mxu0 0.0
    %1405 = vmatmul.mubr.f32.gmra.mxu0 %v1335
    %v1406 = vpop.f32.mrf.mxu0
    %v1407 = vadd.f32 %v1332, %v1406
    %v1408 = vpop.f32.mrf.mxu0
    %1409 = vmatprep.mubr.f32.mxu0 0.0
    %1410 = vmatmul.mubr.f32.gmra.mxu0 %v1338
    %v1411 = vpop.f32.mrf.mxu0
    %v1412 = vadd.f32 %v1332, %v1411
    %v1413 = vpop.f32.mrf.mxu0
    %1414 = vdwg.mxu0
    %1417 = vrot.lane.b32.xlu0 %v1307, 120
    %v1418 = vpop.permute.xlu0 %1417
    %1419 = vrot.lane.b32.xlu0 %v1312, 120
    %v1420 = vpop.permute.xlu0 %1419
    %1423 = vrot.lane.b32.xlu0 %v1307, 112
    %v1424 = vpop.permute.xlu0 %1423
    %1425 = vrot.lane.b32.xlu0 %v1312, 112
    %v1426 = vpop.permute.xlu0 %1425
    %1429 = vrot.lane.b32.xlu0 %v1307, 104
    %v1430 = vpop.permute.xlu0 %1429
    %1431 = vrot.lane.b32.xlu0 %v1312, 104
    %v1432 = vpop.permute.xlu0 %1431
    %v1435 = vmul.f32 %v1307, 0.35355338
    %v1436 = vmul.f32 %v1312, 0.35355338
    %v1437 = vmul.f32 %v1418, 0.35355338
    %v1438 = vmul.f32 %v1420, 0.35355338
    %v1439 = vmul.f32 %v1424, 0.35355338
    %v1440 = vmul.f32 %v1426, 0.35355338
    %v1441 = vmul.f32 %v1430, 0.35355338
    %v1442 = vmul.f32 %v1432, 0.35355338
    %1445 = vrot.lane.b32.xlu0 %v1407, 120
    %v1446 = vpop.permute.xlu0 %1445
    %1447 = vrot.lane.b32.xlu0 %v1412, 120
    %v1448 = vpop.permute.xlu0 %1447
    %1449 = vrot.lane.b32.xlu0 %v1407, 112
    %v1450 = vpop.permute.xlu0 %1449
    %1451 = vrot.lane.b32.xlu0 %v1412, 112
    %v1452 = vpop.permute.xlu0 %1451
    %1453 = vrot.lane.b32.xlu0 %v1407, 104
    %v1454 = vpop.permute.xlu0 %1453
    %1455 = vrot.lane.b32.xlu0 %v1412, 104
    %v1456 = vpop.permute.xlu0 %1455
    %v1458 = vsel %vm268, %v1435, 0
    %v1461 = vsel %vm268, %v1436, 0
    %v1463 = vsel %vm268, %v1407, 0
    %v1465 = vsel %vm268, %v1412, 0
    %1467 = vmatprep.subr.mxu0 0.0
    %1468 = vmatpush1.xpose.msra.mxu0 0.0
    %1469 = vmatprep.subr.mxu0 0.0
    %1470 = vmatpush1.xpose.msra.mxu0 0.0
    %1471 = vmatprep.subr.mxu0 0.0
    %1472 = vmatpush1.xpose.msra.mxu0 0.0
    %1473 = vmatprep.subr.mxu0 0.0
    %1474 = vmatpush1.xpose.msra.mxu0 0.0
    %1475 = vmatprep.subr.mxu0 0.0
    %1476 = vmatpush1.xpose.msra.mxu0 0.0
    %1477 = vmatprep.subr.mxu0 0.0
    %1478 = vmatpush1.xpose.msra.mxu0 0.0
    %1479 = vmatprep.subr.mxu0 0.0
    %1480 = vmatpush1.xpose.msra.mxu0 0.0
    %1481 = vmatprep.subr.mxu0 0.0
    %1482 = vmatpush1.xpose.msra.mxu0 0.0
    %1483 = vmatprep.subr.mxu0 0.0
    %1484 = vmatpush1.xpose.msra.mxu0 0.0
    %1485 = vmatprep.subr.mxu0 0.0
    %1486 = vmatpush1.xpose.msra.mxu0 0.0
    %1487 = vmatprep.subr.mxu0 0.0
    %1488 = vmatpush1.xpose.msra.mxu0 0.0
    %1489 = vmatprep.subr.mxu0 0.0
    %1490 = vmatpush1.xpose.msra.mxu0 0.0
    %1491 = vmatprep.subr.mxu0 0.0
    %1492 = vmatpush1.xpose.msra.mxu0 0.0
    %1493 = vmatprep.subr.mxu0 0.0
    %1494 = vmatpush1.xpose.msra.mxu0 0.0
    %1495 = vmatprep.subr.mxu0 0.0
    %1496 = vmatpush1.xpose.msra.mxu0 %v1465
    %1497 = vmatprep.subr.mxu0 0.0
    %1498 = vmatpush1.xpose.msra.mxu0 %v1463
    %1499 = vmatprep.subr.mxu0 0.0
    %1500 = vmatpush2.xpose.msra.mxu0 0.0
    %1501 = vmatprep.subr.mxu0 0.0
    %1502 = vmatpush2.xpose.msra.mxu0 0.0
    %1503 = vmatprep.subr.mxu0 0.0
    %1504 = vmatpush2.xpose.msra.mxu0 0.0
    %1505 = vmatprep.subr.mxu0 0.0
    %1506 = vmatpush2.xpose.msra.mxu0 0.0
    %1507 = vmatprep.subr.mxu0 0.0
    %1508 = vmatpush2.xpose.msra.mxu0 0.0
    %1509 = vmatprep.subr.mxu0 0.0
    %1510 = vmatpush2.xpose.msra.mxu0 0.0
    %1511 = vmatprep.subr.mxu0 0.0
    %1512 = vmatpush2.xpose.msra.mxu0 0.0
    %1513 = vmatprep.subr.mxu0 0.0
    %1514 = vmatpush2.xpose.msra.mxu0 0.0
    %1515 = vmatprep.subr.mxu0 0.0
    %1516 = vmatpush2.xpose.msra.mxu0 0.0
    %1517 = vmatprep.subr.mxu0 0.0
    %1518 = vmatpush2.xpose.msra.mxu0 0.0
    %1519 = vmatprep.subr.mxu0 0.0
    %1520 = vmatpush2.xpose.msra.mxu0 0.0
    %1521 = vmatprep.subr.mxu0 0.0
    %1522 = vmatpush2.xpose.msra.mxu0 0.0
    %1523 = vmatprep.subr.mxu0 0.0
    %1524 = vmatpush2.xpose.msra.mxu0 0.0
    %1525 = vmatprep.subr.mxu0 0.0
    %1526 = vmatpush2.xpose.msra.mxu0 0.0
    %1527 = vmatprep.subr.mxu0 0.0
    %1528 = vmatpush2.xpose.msra.mxu0 0.0
    %1529 = vmatprep.subr.mxu0 0.0
    %1530 = vmatpush2.xpose.msra.mxu0 0.0
    %1531 = vmatprep.mubr.f32.mxu0 0.0
    %1532 = vmatmul.mubr.f32.gmra.mxu0 %v1458
    %v1533 = vpop.f32.mrf.mxu0
    %v1534 = vadd.f32 %v100, %v1533
    %v1535 = vpop.f32.mrf.mxu0
    %1536 = vmatprep.mubr.f32.mxu0 0.0
    %1537 = vmatmul.mubr.f32.gmra.mxu0 %v1461
    %v1538 = vpop.f32.mrf.mxu0
    %v1539 = vadd.f32 %v101, %v1538
    %v1540 = vpop.f32.mrf.mxu0
    %1541 = vdwg.mxu0
    %v1543 = vsel %vm268, %v1437, 0
    %v1546 = vsel %vm268, %v1438, 0
    %v1548 = vsel %vm268, %v1446, 0
    %v1550 = vsel %vm268, %v1448, 0
    %1552 = vmatprep.subr.mxu0 0.0
    %1553 = vmatpush1.xpose.msra.mxu0 0.0
    %1554 = vmatprep.subr.mxu0 0.0
    %1555 = vmatpush1.xpose.msra.mxu0 0.0
    %1556 = vmatprep.subr.mxu0 0.0
    %1557 = vmatpush1.xpose.msra.mxu0 0.0
    %1558 = vmatprep.subr.mxu0 0.0
    %1559 = vmatpush1.xpose.msra.mxu0 0.0
    %1560 = vmatprep.subr.mxu0 0.0
    %1561 = vmatpush1.xpose.msra.mxu0 0.0
    %1562 = vmatprep.subr.mxu0 0.0
    %1563 = vmatpush1.xpose.msra.mxu0 0.0
    %1564 = vmatprep.subr.mxu0 0.0
    %1565 = vmatpush1.xpose.msra.mxu0 0.0
    %1566 = vmatprep.subr.mxu0 0.0
    %1567 = vmatpush1.xpose.msra.mxu0 0.0
    %1568 = vmatprep.subr.mxu0 0.0
    %1569 = vmatpush1.xpose.msra.mxu0 0.0
    %1570 = vmatprep.subr.mxu0 0.0
    %1571 = vmatpush1.xpose.msra.mxu0 0.0
    %1572 = vmatprep.subr.mxu0 0.0
    %1573 = vmatpush1.xpose.msra.mxu0 0.0
    %1574 = vmatprep.subr.mxu0 0.0
    %1575 = vmatpush1.xpose.msra.mxu0 0.0
    %1576 = vmatprep.subr.mxu0 0.0
    %1577 = vmatpush1.xpose.msra.mxu0 0.0
    %1578 = vmatprep.subr.mxu0 0.0
    %1579 = vmatpush1.xpose.msra.mxu0 0.0
    %1580 = vmatprep.subr.mxu0 0.0
    %1581 = vmatpush1.xpose.msra.mxu0 %v1550
    %1582 = vmatprep.subr.mxu0 0.0
    %1583 = vmatpush1.xpose.msra.mxu0 %v1548
    %1584 = vmatprep.subr.mxu0 0.0
    %1585 = vmatpush2.xpose.msra.mxu0 0.0
    %1586 = vmatprep.subr.mxu0 0.0
    %1587 = vmatpush2.xpose.msra.mxu0 0.0
    %1588 = vmatprep.subr.mxu0 0.0
    %1589 = vmatpush2.xpose.msra.mxu0 0.0
    %1590 = vmatprep.subr.mxu0 0.0
    %1591 = vmatpush2.xpose.msra.mxu0 0.0
    %1592 = vmatprep.subr.mxu0 0.0
    %1593 = vmatpush2.xpose.msra.mxu0 0.0
    %1594 = vmatprep.subr.mxu0 0.0
    %1595 = vmatpush2.xpose.msra.mxu0 0.0
    %1596 = vmatprep.subr.mxu0 0.0
    %1597 = vmatpush2.xpose.msra.mxu0 0.0
    %1598 = vmatprep.subr.mxu0 0.0
    %1599 = vmatpush2.xpose.msra.mxu0 0.0
    %1600 = vmatprep.subr.mxu0 0.0
    %1601 = vmatpush2.xpose.msra.mxu0 0.0
    %1602 = vmatprep.subr.mxu0 0.0
    %1603 = vmatpush2.xpose.msra.mxu0 0.0
    %1604 = vmatprep.subr.mxu0 0.0
    %1605 = vmatpush2.xpose.msra.mxu0 0.0
    %1606 = vmatprep.subr.mxu0 0.0
    %1607 = vmatpush2.xpose.msra.mxu0 0.0
    %1608 = vmatprep.subr.mxu0 0.0
    %1609 = vmatpush2.xpose.msra.mxu0 0.0
    %1610 = vmatprep.subr.mxu0 0.0
    %1611 = vmatpush2.xpose.msra.mxu0 0.0
    %1612 = vmatprep.subr.mxu0 0.0
    %1613 = vmatpush2.xpose.msra.mxu0 0.0
    %1614 = vmatprep.subr.mxu0 0.0
    %1615 = vmatpush2.xpose.msra.mxu0 0.0
    %1616 = vmatprep.mubr.f32.mxu0 0.0
    %1617 = vmatmul.mubr.f32.gmra.mxu0 %v1543
    %v1618 = vpop.f32.mrf.mxu0
    %v1619 = vadd.f32 %v100, %v1618
    %v1620 = vpop.f32.mrf.mxu0
    %1621 = vmatprep.mubr.f32.mxu0 0.0
    %1622 = vmatmul.mubr.f32.gmra.mxu0 %v1546
    %v1623 = vpop.f32.mrf.mxu0
    %v1624 = vadd.f32 %v101, %v1623
    %v1625 = vpop.f32.mrf.mxu0
    %1626 = vdwg.mxu0
    %v1628 = vsel %vm268, %v1439, 0
    %v1631 = vsel %vm268, %v1440, 0
    %v1633 = vsel %vm268, %v1450, 0
    %v1635 = vsel %vm268, %v1452, 0
    %1637 = vmatprep.subr.mxu0 0.0
    %1638 = vmatpush1.xpose.msra.mxu0 0.0
    %1639 = vmatprep.subr.mxu0 0.0
    %1640 = vmatpush1.xpose.msra.mxu0 0.0
    %1641 = vmatprep.subr.mxu0 0.0
    %1642 = vmatpush1.xpose.msra.mxu0 0.0
    %1643 = vmatprep.subr.mxu0 0.0
    %1644 = vmatpush1.xpose.msra.mxu0 0.0
    %1645 = vmatprep.subr.mxu0 0.0
    %1646 = vmatpush1.xpose.msra.mxu0 0.0
    %1647 = vmatprep.subr.mxu0 0.0
    %1648 = vmatpush1.xpose.msra.mxu0 0.0
    %1649 = vmatprep.subr.mxu0 0.0
    %1650 = vmatpush1.xpose.msra.mxu0 0.0
    %1651 = vmatprep.subr.mxu0 0.0
    %1652 = vmatpush1.xpose.msra.mxu0 0.0
    %1653 = vmatprep.subr.mxu0 0.0
    %1654 = vmatpush1.xpose.msra.mxu0 0.0
    %1655 = vmatprep.subr.mxu0 0.0
    %1656 = vmatpush1.xpose.msra.mxu0 0.0
    %1657 = vmatprep.subr.mxu0 0.0
    %1658 = vmatpush1.xpose.msra.mxu0 0.0
    %1659 = vmatprep.subr.mxu0 0.0
    %1660 = vmatpush1.xpose.msra.mxu0 0.0
    %1661 = vmatprep.subr.mxu0 0.0
    %1662 = vmatpush1.xpose.msra.mxu0 0.0
    %1663 = vmatprep.subr.mxu0 0.0
    %1664 = vmatpush1.xpose.msra.mxu0 0.0
    %1665 = vmatprep.subr.mxu0 0.0
    %1666 = vmatpush1.xpose.msra.mxu0 %v1635
    %1667 = vmatprep.subr.mxu0 0.0
    %1668 = vmatpush1.xpose.msra.mxu0 %v1633
    %1669 = vmatprep.subr.mxu0 0.0
    %1670 = vmatpush2.xpose.msra.mxu0 0.0
    %1671 = vmatprep.subr.mxu0 0.0
    %1672 = vmatpush2.xpose.msra.mxu0 0.0
    %1673 = vmatprep.subr.mxu0 0.0
    %1674 = vmatpush2.xpose.msra.mxu0 0.0
    %1675 = vmatprep.subr.mxu0 0.0
    %1676 = vmatpush2.xpose.msra.mxu0 0.0
    %1677 = vmatprep.subr.mxu0 0.0
    %1678 = vmatpush2.xpose.msra.mxu0 0.0
    %1679 = vmatprep.subr.mxu0 0.0
    %1680 = vmatpush2.xpose.msra.mxu0 0.0
    %1681 = vmatprep.subr.mxu0 0.0
    %1682 = vmatpush2.xpose.msra.mxu0 0.0
    %1683 = vmatprep.subr.mxu0 0.0
    %1684 = vmatpush2.xpose.msra.mxu0 0.0
    %1685 = vmatprep.subr.mxu0 0.0
    %1686 = vmatpush2.xpose.msra.mxu0 0.0
    %1687 = vmatprep.subr.mxu0 0.0
    %1688 = vmatpush2.xpose.msra.mxu0 0.0
    %1689 = vmatprep.subr.mxu0 0.0
    %1690 = vmatpush2.xpose.msra.mxu0 0.0
    %1691 = vmatprep.subr.mxu0 0.0
    %1692 = vmatpush2.xpose.msra.mxu0 0.0
    %1693 = vmatprep.subr.mxu0 0.0
    %1694 = vmatpush2.xpose.msra.mxu0 0.0
    %1695 = vmatprep.subr.mxu0 0.0
    %1696 = vmatpush2.xpose.msra.mxu0 0.0
    %1697 = vmatprep.subr.mxu0 0.0
    %1698 = vmatpush2.xpose.msra.mxu0 0.0
    %1699 = vmatprep.subr.mxu0 0.0
    %1700 = vmatpush2.xpose.msra.mxu0 0.0
    %1701 = vmatprep.mubr.f32.mxu0 0.0
    %1702 = vmatmul.mubr.f32.gmra.mxu0 %v1628
    %v1703 = vpop.f32.mrf.mxu0
    %v1704 = vadd.f32 %v100, %v1703
    %v1705 = vpop.f32.mrf.mxu0
    %1706 = vmatprep.mubr.f32.mxu0 0.0
    %1707 = vmatmul.mubr.f32.gmra.mxu0 %v1631
    %v1708 = vpop.f32.mrf.mxu0
    %v1709 = vadd.f32 %v101, %v1708
    %v1710 = vpop.f32.mrf.mxu0
    %1711 = vdwg.mxu0
    %v1713 = vsel %vm268, %v1441, 0
    %v1716 = vsel %vm268, %v1442, 0
    %v1718 = vsel %vm268, %v1454, 0
    %v1720 = vsel %vm268, %v1456, 0
    %1722 = vmatprep.subr.mxu0 0.0
    %1723 = vmatpush1.xpose.msra.mxu0 0.0
    %1724 = vmatprep.subr.mxu0 0.0
    %1725 = vmatpush1.xpose.msra.mxu0 0.0
    %1726 = vmatprep.subr.mxu0 0.0
    %1727 = vmatpush1.xpose.msra.mxu0 0.0
    %1728 = vmatprep.subr.mxu0 0.0
    %1729 = vmatpush1.xpose.msra.mxu0 0.0
    %1730 = vmatprep.subr.mxu0 0.0
    %1731 = vmatpush1.xpose.msra.mxu0 0.0
    %1732 = vmatprep.subr.mxu0 0.0
    %1733 = vmatpush1.xpose.msra.mxu0 0.0
    %1734 = vmatprep.subr.mxu0 0.0
    %1735 = vmatpush1.xpose.msra.mxu0 0.0
    %1736 = vmatprep.subr.mxu0 0.0
    %1737 = vmatpush1.xpose.msra.mxu0 0.0
    %1738 = vmatprep.subr.mxu0 0.0
    %1739 = vmatpush1.xpose.msra.mxu0 0.0
    %1740 = vmatprep.subr.mxu0 0.0
    %1741 = vmatpush1.xpose.msra.mxu0 0.0
    %1742 = vmatprep.subr.mxu0 0.0
    %1743 = vmatpush1.xpose.msra.mxu0 0.0
    %1744 = vmatprep.subr.mxu0 0.0
    %1745 = vmatpush1.xpose.msra.mxu0 0.0
    %1746 = vmatprep.subr.mxu0 0.0
    %1747 = vmatpush1.xpose.msra.mxu0 0.0
    %1748 = vmatprep.subr.mxu0 0.0
    %1749 = vmatpush1.xpose.msra.mxu0 0.0
    %1750 = vmatprep.subr.mxu0 0.0
    %1751 = vmatpush1.xpose.msra.mxu0 %v1720
    %1752 = vmatprep.subr.mxu0 0.0
    %1753 = vmatpush1.xpose.msra.mxu0 %v1718
    %1754 = vmatprep.subr.mxu0 0.0
    %1755 = vmatpush2.xpose.msra.mxu0 0.0
    %1756 = vmatprep.subr.mxu0 0.0
    %1757 = vmatpush2.xpose.msra.mxu0 0.0
    %1758 = vmatprep.subr.mxu0 0.0
    %1759 = vmatpush2.xpose.msra.mxu0 0.0
    %1760 = vmatprep.subr.mxu0 0.0
    %1761 = vmatpush2.xpose.msra.mxu0 0.0
    %1762 = vmatprep.subr.mxu0 0.0
    %1763 = vmatpush2.xpose.msra.mxu0 0.0
    %1764 = vmatprep.subr.mxu0 0.0
    %1765 = vmatpush2.xpose.msra.mxu0 0.0
    %1766 = vmatprep.subr.mxu0 0.0
    %1767 = vmatpush2.xpose.msra.mxu0 0.0
    %1768 = vmatprep.subr.mxu0 0.0
    %1769 = vmatpush2.xpose.msra.mxu0 0.0
    %1770 = vmatprep.subr.mxu0 0.0
    %1771 = vmatpush2.xpose.msra.mxu0 0.0
    %1772 = vmatprep.subr.mxu0 0.0
    %1773 = vmatpush2.xpose.msra.mxu0 0.0
    %1774 = vmatprep.subr.mxu0 0.0
    %1775 = vmatpush2.xpose.msra.mxu0 0.0
    %1776 = vmatprep.subr.mxu0 0.0
    %1777 = vmatpush2.xpose.msra.mxu0 0.0
    %1778 = vmatprep.subr.mxu0 0.0
    %1779 = vmatpush2.xpose.msra.mxu0 0.0
    %1780 = vmatprep.subr.mxu0 0.0
    %1781 = vmatpush2.xpose.msra.mxu0 0.0
    %1782 = vmatprep.subr.mxu0 0.0
    %1783 = vmatpush2.xpose.msra.mxu0 0.0
    %1784 = vmatprep.subr.mxu0 0.0
    %1785 = vmatpush2.xpose.msra.mxu0 0.0
    %1786 = vmatprep.mubr.f32.mxu0 0.0
    %1787 = vmatmul.mubr.f32.gmra.mxu0 %v1713
    %v1788 = vpop.f32.mrf.mxu0
    %v1789 = vadd.f32 %v100, %v1788
    %v1790 = vpop.f32.mrf.mxu0
    %1791 = vmatprep.mubr.f32.mxu0 0.0
    %1792 = vmatmul.mubr.f32.gmra.mxu0 %v1716
    %v1793 = vpop.f32.mrf.mxu0
    %v1794 = vadd.f32 %v101, %v1793
    %v1795 = vpop.f32.mrf.mxu0
    %1796 = vdwg.mxu0
    %v1797 = vsel %vm621, %v1534, -inf
    %1798 = vmax.xlane.f32.xlu0 %v1797
    %v1799 = vpop.xlane.xlu0 %1798
    %v1800 = vsel %vm621, %v1539, -inf
    %1801 = vmax.xlane.f32.xlu0 %v1800
    %v1802 = vpop.xlane.xlu0 %1801
    %v1803 = vsel %vm621, %v1619, -inf
    %1804 = vmax.xlane.f32.xlu0 %v1803
    %v1805 = vpop.xlane.xlu0 %1804
    %v1806 = vsel %vm621, %v1624, -inf
    %1807 = vmax.xlane.f32.xlu0 %v1806
    %v1808 = vpop.xlane.xlu0 %1807
    %v1809 = vsel %vm621, %v1704, -inf
    %1810 = vmax.xlane.f32.xlu0 %v1809
    %v1811 = vpop.xlane.xlu0 %1810
    %v1812 = vsel %vm621, %v1709, -inf
    %1813 = vmax.xlane.f32.xlu0 %v1812
    %v1814 = vpop.xlane.xlu0 %1813
    %v1815 = vsel %vm621, %v1789, -inf
    %1816 = vmax.xlane.f32.xlu0 %v1815
    %v1817 = vpop.xlane.xlu0 %1816
    %v1818 = vsel %vm621, %v1794, -inf
    %1819 = vmax.xlane.f32.xlu0 %v1818
    %v1820 = vpop.xlane.xlu0 %1819
    %v1821 = vsub.f32 %v1534, %v1799
    %v1822 = vsub.f32 %v1539, %v1802
    %v1823 = vsub.f32 %v1619, %v1805
    %v1824 = vsub.f32 %v1624, %v1808
    %v1825 = vsub.f32 %v1704, %v1811
    %v1826 = vsub.f32 %v1709, %v1814
    %v1827 = vsub.f32 %v1789, %v1817
    %v1828 = vsub.f32 %v1794, %v1820
    %v1829 = vmul.f32 %v1821, 1.442695
    %v1830 = vpow.pop %v1829
    %v1831 = vmul.f32 %v1822, 1.442695
    %v1832 = vpow.pop %v1831
    %v1833 = vmul.f32 %v1823, 1.442695
    %v1834 = vpow.pop %v1833
    %v1835 = vmul.f32 %v1824, 1.442695
    %v1836 = vpow.pop %v1835
    %v1837 = vmul.f32 %v1825, 1.442695
    %v1838 = vpow.pop %v1837
    %v1839 = vmul.f32 %v1826, 1.442695
    %v1840 = vpow.pop %v1839
    %v1841 = vmul.f32 %v1827, 1.442695
    %v1842 = vpow.pop %v1841
    %v1843 = vmul.f32 %v1828, 1.442695
    %v1844 = vpow.pop %v1843
    %v1845 = vsel %vm621, %v1830, 0.0
    %1846 = vadd.xlane.f32.xlu0 %v1845
    %v1847 = vpop.xlane.xlu0 %1846
    %v1848 = vsel %vm621, %v1832, 0.0
    %1849 = vadd.xlane.f32.xlu0 %v1848
    %v1850 = vpop.xlane.xlu0 %1849
    %v1851 = vsel %vm621, %v1834, 0.0
    %1852 = vadd.xlane.f32.xlu0 %v1851
    %v1853 = vpop.xlane.xlu0 %1852
    %v1854 = vsel %vm621, %v1836, 0.0
    %1855 = vadd.xlane.f32.xlu0 %v1854
    %v1856 = vpop.xlane.xlu0 %1855
    %v1857 = vsel %vm621, %v1838, 0.0
    %1858 = vadd.xlane.f32.xlu0 %v1857
    %v1859 = vpop.xlane.xlu0 %1858
    %v1860 = vsel %vm621, %v1840, 0.0
    %1861 = vadd.xlane.f32.xlu0 %v1860
    %v1862 = vpop.xlane.xlu0 %1861
    %v1863 = vsel %vm621, %v1842, 0.0
    %1864 = vadd.xlane.f32.xlu0 %v1863
    %v1865 = vpop.xlane.xlu0 %1864
    %v1866 = vsel %vm621, %v1844, 0.0
    %1867 = vadd.xlane.f32.xlu0 %v1866
    %v1868 = vpop.xlane.xlu0 %1867
    %v1869 = vrcp.pop %v1847
    %v1870 = vmul.f32 %v1830, %v1869
    %v1871 = vrcp.pop %v1850
    %v1872 = vmul.f32 %v1832, %v1871
    %v1873 = vrcp.pop %v1853
    %v1874 = vmul.f32 %v1834, %v1873
    %v1875 = vrcp.pop %v1856
    %v1876 = vmul.f32 %v1836, %v1875
    %v1877 = vrcp.pop %v1859
    %v1878 = vmul.f32 %v1838, %v1877
    %v1879 = vrcp.pop %v1862
    %v1880 = vmul.f32 %v1840, %v1879
    %v1881 = vrcp.pop %v1865
    %v1882 = vmul.f32 %v1842, %v1881
    %v1883 = vrcp.pop %v1868
    %v1884 = vmul.f32 %v1844, %v1883
    %1885 = vrot.lane.b32.xlu0 %v1407, 96
    %v1886 = vpop.permute.xlu0 %1885
    %1887 = vrot.lane.b32.xlu0 %v1412, 96
    %v1888 = vpop.permute.xlu0 %1887
    %v1892 = vsel %vm621, %v1870, 0
    %v1895 = vsel %vm621, %v1872, 0
    %1897 = vmatprep.subr.mxu0 0.0
    %1898 = vmatpush1.msra.mxu0 0.0
    %1899 = vmatprep.subr.mxu0 0.0
    %1900 = vmatpush1.msra.mxu0 0.0
    %1901 = vmatprep.subr.mxu0 0.0
    %1902 = vmatpush1.msra.mxu0 0.0
    %1903 = vmatprep.subr.mxu0 0.0
    %1904 = vmatpush1.msra.mxu0 0.0
    %1905 = vmatprep.subr.mxu0 0.0
    %1906 = vmatpush1.msra.mxu0 0.0
    %1907 = vmatprep.subr.mxu0 0.0
    %1908 = vmatpush1.msra.mxu0 0.0
    %1909 = vmatprep.subr.mxu0 0.0
    %1910 = vmatpush1.msra.mxu0 0.0
    %1911 = vmatprep.subr.mxu0 0.0
    %1912 = vmatpush1.msra.mxu0 0.0
    %1913 = vmatprep.subr.mxu0 0.0
    %1914 = vmatpush1.msra.mxu0 0.0
    %1915 = vmatprep.subr.mxu0 0.0
    %1916 = vmatpush1.msra.mxu0 0.0
    %1917 = vmatprep.subr.mxu0 0.0
    %1918 = vmatpush1.msra.mxu0 0.0
    %1919 = vmatprep.subr.mxu0 0.0
    %1920 = vmatpush1.msra.mxu0 0.0
    %1921 = vmatprep.subr.mxu0 0.0
    %1922 = vmatpush1.msra.mxu0 0.0
    %1923 = vmatprep.subr.mxu0 0.0
    %1924 = vmatpush1.msra.mxu0 0.0
    %1925 = vmatprep.subr.mxu0 0.0
    %1926 = vmatpush1.msra.mxu0 %v1888
    %1927 = vmatprep.subr.mxu0 0.0
    %1928 = vmatpush1.msra.mxu0 %v1886
    %1929 = vmatprep.subr.mxu0 0.0
    %1930 = vmatpush2.msra.mxu0 0.0
    %1931 = vmatprep.subr.mxu0 0.0
    %1932 = vmatpush2.msra.mxu0 0.0
    %1933 = vmatprep.subr.mxu0 0.0
    %1934 = vmatpush2.msra.mxu0 0.0
    %1935 = vmatprep.subr.mxu0 0.0
    %1936 = vmatpush2.msra.mxu0 0.0
    %1937 = vmatprep.subr.mxu0 0.0
    %1938 = vmatpush2.msra.mxu0 0.0
    %1939 = vmatprep.subr.mxu0 0.0
    %1940 = vmatpush2.msra.mxu0 0.0
    %1941 = vmatprep.subr.mxu0 0.0
    %1942 = vmatpush2.msra.mxu0 0.0
    %1943 = vmatprep.subr.mxu0 0.0
    %1944 = vmatpush2.msra.mxu0 0.0
    %1945 = vmatprep.subr.mxu0 0.0
    %1946 = vmatpush2.msra.mxu0 0.0
    %1947 = vmatprep.subr.mxu0 0.0
    %1948 = vmatpush2.msra.mxu0 0.0
    %1949 = vmatprep.subr.mxu0 0.0
    %1950 = vmatpush2.msra.mxu0 0.0
    %1951 = vmatprep.subr.mxu0 0.0
    %1952 = vmatpush2.msra.mxu0 0.0
    %1953 = vmatprep.subr.mxu0 0.0
    %1954 = vmatpush2.msra.mxu0 0.0
    %1955 = vmatprep.subr.mxu0 0.0
    %1956 = vmatpush2.msra.mxu0 0.0
    %1957 = vmatprep.subr.mxu0 0.0
    %1958 = vmatpush2.msra.mxu0 0.0
    %1959 = vmatprep.subr.mxu0 0.0
    %1960 = vmatpush2.msra.mxu0 0.0
    %1961 = vmatprep.mubr.f32.mxu0 0.0
    %1962 = vmatmul.mubr.f32.gmra.mxu0 %v1892
    %v1963 = vpop.f32.mrf.mxu0
    %v1964 = vadd.f32 0.0, %v1963
    %v1965 = vpop.f32.mrf.mxu0
    %1966 = vmatprep.mubr.f32.mxu0 0.0
    %1967 = vmatmul.mubr.f32.gmra.mxu0 %v1895
    %v1968 = vpop.f32.mrf.mxu0
    %v1969 = vadd.f32 0.0, %v1968
    %v1970 = vpop.f32.mrf.mxu0
    %1971 = vdwg.mxu0
    %1972 = vrot.lane.b32.xlu0 %v1446, 96
    %v1973 = vpop.permute.xlu0 %1972
    %1974 = vrot.lane.b32.xlu0 %v1448, 96
    %v1975 = vpop.permute.xlu0 %1974
    %v1979 = vsel %vm621, %v1874, 0
    %v1982 = vsel %vm621, %v1876, 0
    %1984 = vmatprep.subr.mxu0 0.0
    %1985 = vmatpush1.msra.mxu0 0.0
    %1986 = vmatprep.subr.mxu0 0.0
    %1987 = vmatpush1.msra.mxu0 0.0
    %1988 = vmatprep.subr.mxu0 0.0
    %1989 = vmatpush1.msra.mxu0 0.0
    %1990 = vmatprep.subr.mxu0 0.0
    %1991 = vmatpush1.msra.mxu0 0.0
    %1992 = vmatprep.subr.mxu0 0.0
    %1993 = vmatpush1.msra.mxu0 0.0
    %1994 = vmatprep.subr.mxu0 0.0
    %1995 = vmatpush1.msra.mxu0 0.0
    %1996 = vmatprep.subr.mxu0 0.0
    %1997 = vmatpush1.msra.mxu0 0.0
    %1998 = vmatprep.subr.mxu0 0.0
    %1999 = vmatpush1.msra.mxu0 0.0
    %2000 = vmatprep.subr.mxu0 0.0
    %2001 = vmatpush1.msra.mxu0 0.0
    %2002 = vmatprep.subr.mxu0 0.0
    %2003 = vmatpush1.msra.mxu0 0.0
    %2004 = vmatprep.subr.mxu0 0.0
    %2005 = vmatpush1.msra.mxu0 0.0
    %2006 = vmatprep.subr.mxu0 0.0
    %2007 = vmatpush1.msra.mxu0 0.0
    %2008 = vmatprep.subr.mxu0 0.0
    %2009 = vmatpush1.msra.mxu0 0.0
    %2010 = vmatprep.subr.mxu0 0.0
    %2011 = vmatpush1.msra.mxu0 0.0
    %2012 = vmatprep.subr.mxu0 0.0
    %2013 = vmatpush1.msra.mxu0 %v1975
    %2014 = vmatprep.subr.mxu0 0.0
    %2015 = vmatpush1.msra.mxu0 %v1973
    %2016 = vmatprep.subr.mxu0 0.0
    %2017 = vmatpush2.msra.mxu0 0.0
    %2018 = vmatprep.subr.mxu0 0.0
    %2019 = vmatpush2.msra.mxu0 0.0
    %2020 = vmatprep.subr.mxu0 0.0
    %2021 = vmatpush2.msra.mxu0 0.0
    %2022 = vmatprep.subr.mxu0 0.0
    %2023 = vmatpush2.msra.mxu0 0.0
    %2024 = vmatprep.subr.mxu0 0.0
    %2025 = vmatpush2.msra.mxu0 0.0
    %2026 = vmatprep.subr.mxu0 0.0
    %2027 = vmatpush2.msra.mxu0 0.0
    %2028 = vmatprep.subr.mxu0 0.0
    %2029 = vmatpush2.msra.mxu0 0.0
    %2030 = vmatprep.subr.mxu0 0.0
    %2031 = vmatpush2.msra.mxu0 0.0
    %2032 = vmatprep.subr.mxu0 0.0
    %2033 = vmatpush2.msra.mxu0 0.0
    %2034 = vmatprep.subr.mxu0 0.0
    %2035 = vmatpush2.msra.mxu0 0.0
    %2036 = vmatprep.subr.mxu0 0.0
    %2037 = vmatpush2.msra.mxu0 0.0
    %2038 = vmatprep.subr.mxu0 0.0
    %2039 = vmatpush2.msra.mxu0 0.0
    %2040 = vmatprep.subr.mxu0 0.0
    %2041 = vmatpush2.msra.mxu0 0.0
    %2042 = vmatprep.subr.mxu0 0.0
    %2043 = vmatpush2.msra.mxu0 0.0
    %2044 = vmatprep.subr.mxu0 0.0
    %2045 = vmatpush2.msra.mxu0 0.0
    %2046 = vmatprep.subr.mxu0 0.0
    %2047 = vmatpush2.msra.mxu0 0.0
    %2048 = vmatprep.mubr.f32.mxu0 0.0
    %2049 = vmatmul.mubr.f32.gmra.mxu0 %v1979
    %v2050 = vpop.f32.mrf.mxu0
    %v2051 = vadd.f32 0.0, %v2050
    %v2052 = vpop.f32.mrf.mxu0
    %2053 = vmatprep.mubr.f32.mxu0 0.0
    %2054 = vmatmul.mubr.f32.gmra.mxu0 %v1982
    %v2055 = vpop.f32.mrf.mxu0
    %v2056 = vadd.f32 0.0, %v2055
    %v2057 = vpop.f32.mrf.mxu0
    %2058 = vdwg.mxu0
    %2059 = vrot.lane.b32.xlu0 %v1450, 96
    %v2060 = vpop.permute.xlu0 %2059
    %2061 = vrot.lane.b32.xlu0 %v1452, 96
    %v2062 = vpop.permute.xlu0 %2061
    %v2066 = vsel %vm621, %v1878, 0
    %v2069 = vsel %vm621, %v1880, 0
    %2071 = vmatprep.subr.mxu0 0.0
    %2072 = vmatpush1.msra.mxu0 0.0
    %2073 = vmatprep.subr.mxu0 0.0
    %2074 = vmatpush1.msra.mxu0 0.0
    %2075 = vmatprep.subr.mxu0 0.0
    %2076 = vmatpush1.msra.mxu0 0.0
    %2077 = vmatprep.subr.mxu0 0.0
    %2078 = vmatpush1.msra.mxu0 0.0
    %2079 = vmatprep.subr.mxu0 0.0
    %2080 = vmatpush1.msra.mxu0 0.0
    %2081 = vmatprep.subr.mxu0 0.0
    %2082 = vmatpush1.msra.mxu0 0.0
    %2083 = vmatprep.subr.mxu0 0.0
    %2084 = vmatpush1.msra.mxu0 0.0
    %2085 = vmatprep.subr.mxu0 0.0
    %2086 = vmatpush1.msra.mxu0 0.0
    %2087 = vmatprep.subr.mxu0 0.0
    %2088 = vmatpush1.msra.mxu0 0.0
    %2089 = vmatprep.subr.mxu0 0.0
    %2090 = vmatpush1.msra.mxu0 0.0
    %2091 = vmatprep.subr.mxu0 0.0
    %2092 = vmatpush1.msra.mxu0 0.0
    %2093 = vmatprep.subr.mxu0 0.0
    %2094 = vmatpush1.msra.mxu0 0.0
    %2095 = vmatprep.subr.mxu0 0.0
    %2096 = vmatpush1.msra.mxu0 0.0
    %2097 = vmatprep.subr.mxu0 0.0
    %2098 = vmatpush1.msra.mxu0 0.0
    %2099 = vmatprep.subr.mxu0 0.0
    %2100 = vmatpush1.msra.mxu0 %v2062
    %2101 = vmatprep.subr.mxu0 0.0
    %2102 = vmatpush1.msra.mxu0 %v2060
    %2103 = vmatprep.subr.mxu0 0.0
    %2104 = vmatpush2.msra.mxu0 0.0
    %2105 = vmatprep.subr.mxu0 0.0
    %2106 = vmatpush2.msra.mxu0 0.0
    %2107 = vmatprep.subr.mxu0 0.0
    %2108 = vmatpush2.msra.mxu0 0.0
    %2109 = vmatprep.subr.mxu0 0.0
    %2110 = vmatpush2.msra.mxu0 0.0
    %2111 = vmatprep.subr.mxu0 0.0
    %2112 = vmatpush2.msra.mxu0 0.0
    %2113 = vmatprep.subr.mxu0 0.0
    %2114 = vmatpush2.msra.mxu0 0.0
    %2115 = vmatprep.subr.mxu0 0.0
    %2116 = vmatpush2.msra.mxu0 0.0
    %2117 = vmatprep.subr.mxu0 0.0
    %2118 = vmatpush2.msra.mxu0 0.0
    %2119 = vmatprep.subr.mxu0 0.0
    %2120 = vmatpush2.msra.mxu0 0.0
    %2121 = vmatprep.subr.mxu0 0.0
    %2122 = vmatpush2.msra.mxu0 0.0
    %2123 = vmatprep.subr.mxu0 0.0
    %2124 = vmatpush2.msra.mxu0 0.0
    %2125 = vmatprep.subr.mxu0 0.0
    %2126 = vmatpush2.msra.mxu0 0.0
    %2127 = vmatprep.subr.mxu0 0.0
    %2128 = vmatpush2.msra.mxu0 0.0
    %2129 = vmatprep.subr.mxu0 0.0
    %2130 = vmatpush2.msra.mxu0 0.0
    %2131 = vmatprep.subr.mxu0 0.0
    %2132 = vmatpush2.msra.mxu0 0.0
    %2133 = vmatprep.subr.mxu0 0.0
    %2134 = vmatpush2.msra.mxu0 0.0
    %2135 = vmatprep.mubr.f32.mxu0 0.0
    %2136 = vmatmul.mubr.f32.gmra.mxu0 %v2066
    %v2137 = vpop.f32.mrf.mxu0
    %v2138 = vadd.f32 0.0, %v2137
    %v2139 = vpop.f32.mrf.mxu0
    %2140 = vmatprep.mubr.f32.mxu0 0.0
    %2141 = vmatmul.mubr.f32.gmra.mxu0 %v2069
    %v2142 = vpop.f32.mrf.mxu0
    %v2143 = vadd.f32 0.0, %v2142
    %v2144 = vpop.f32.mrf.mxu0
    %2145 = vdwg.mxu0
    %2146 = vrot.lane.b32.xlu0 %v1454, 96
    %v2147 = vpop.permute.xlu0 %2146
    %2148 = vrot.lane.b32.xlu0 %v1456, 96
    %v2149 = vpop.permute.xlu0 %2148
    %v2153 = vsel %vm621, %v1882, 0
    %v2156 = vsel %vm621, %v1884, 0
    %2158 = vmatprep.subr.mxu0 0.0
    %2159 = vmatpush1.msra.mxu0 0.0
    %2160 = vmatprep.subr.mxu0 0.0
    %2161 = vmatpush1.msra.mxu0 0.0
    %2162 = vmatprep.subr.mxu0 0.0
    %2163 = vmatpush1.msra.mxu0 0.0
    %2164 = vmatprep.subr.mxu0 0.0
    %2165 = vmatpush1.msra.mxu0 0.0
    %2166 = vmatprep.subr.mxu0 0.0
    %2167 = vmatpush1.msra.mxu0 0.0
    %2168 = vmatprep.subr.mxu0 0.0
    %2169 = vmatpush1.msra.mxu0 0.0
    %2170 = vmatprep.subr.mxu0 0.0
    %2171 = vmatpush1.msra.mxu0 0.0
    %2172 = vmatprep.subr.mxu0 0.0
    %2173 = vmatpush1.msra.mxu0 0.0
    %2174 = vmatprep.subr.mxu0 0.0
    %2175 = vmatpush1.msra.mxu0 0.0
    %2176 = vmatprep.subr.mxu0 0.0
    %2177 = vmatpush1.msra.mxu0 0.0
    %2178 = vmatprep.subr.mxu0 0.0
    %2179 = vmatpush1.msra.mxu0 0.0
    %2180 = vmatprep.subr.mxu0 0.0
    %2181 = vmatpush1.msra.mxu0 0.0
    %2182 = vmatprep.subr.mxu0 0.0
    %2183 = vmatpush1.msra.mxu0 0.0
    %2184 = vmatprep.subr.mxu0 0.0
    %2185 = vmatpush1.msra.mxu0 0.0
    %2186 = vmatprep.subr.mxu0 0.0
    %2187 = vmatpush1.msra.mxu0 %v2149
    %2188 = vmatprep.subr.mxu0 0.0
    %2189 = vmatpush1.msra.mxu0 %v2147
    %2190 = vmatprep.subr.mxu0 0.0
    %2191 = vmatpush2.msra.mxu0 0.0
    %2192 = vmatprep.subr.mxu0 0.0
    %2193 = vmatpush2.msra.mxu0 0.0
    %2194 = vmatprep.subr.mxu0 0.0
    %2195 = vmatpush2.msra.mxu0 0.0
    %2196 = vmatprep.subr.mxu0 0.0
    %2197 = vmatpush2.msra.mxu0 0.0
    %2198 = vmatprep.subr.mxu0 0.0
    %2199 = vmatpush2.msra.mxu0 0.0
    %2200 = vmatprep.subr.mxu0 0.0
    %2201 = vmatpush2.msra.mxu0 0.0
    %2202 = vmatprep.subr.mxu0 0.0
    %2203 = vmatpush2.msra.mxu0 0.0
    %2204 = vmatprep.subr.mxu0 0.0
    %2205 = vmatpush2.msra.mxu0 0.0
    %2206 = vmatprep.subr.mxu0 0.0
    %2207 = vmatpush2.msra.mxu0 0.0
    %2208 = vmatprep.subr.mxu0 0.0
    %2209 = vmatpush2.msra.mxu0 0.0
    %2210 = vmatprep.subr.mxu0 0.0
    %2211 = vmatpush2.msra.mxu0 0.0
    %2212 = vmatprep.subr.mxu0 0.0
    %2213 = vmatpush2.msra.mxu0 0.0
    %2214 = vmatprep.subr.mxu0 0.0
    %2215 = vmatpush2.msra.mxu0 0.0
    %2216 = vmatprep.subr.mxu0 0.0
    %2217 = vmatpush2.msra.mxu0 0.0
    %2218 = vmatprep.subr.mxu0 0.0
    %2219 = vmatpush2.msra.mxu0 0.0
    %2220 = vmatprep.subr.mxu0 0.0
    %2221 = vmatpush2.msra.mxu0 0.0
    %2222 = vmatprep.mubr.f32.mxu0 0.0
    %2223 = vmatmul.mubr.f32.gmra.mxu0 %v2153
    %v2224 = vpop.f32.mrf.mxu0
    %v2225 = vadd.f32 0.0, %v2224
    %v2226 = vpop.f32.mrf.mxu0
    %2227 = vmatprep.mubr.f32.mxu0 0.0
    %2228 = vmatmul.mubr.f32.gmra.mxu0 %v2156
    %v2229 = vpop.f32.mrf.mxu0
    %v2230 = vadd.f32 0.0, %v2229
    %v2231 = vpop.f32.mrf.mxu0
    %2232 = vdwg.mxu0
    %2235 = vrot.lane.b32.xlu0 %v2051, 8
    %v2236 = vpop.permute.xlu0 %2235
    %2237 = vrot.lane.b32.xlu0 %v2056, 8
    %v2238 = vpop.permute.xlu0 %2237
    %2243 = vrot.lane.b32.xlu0 %v2138, 16
    %v2244 = vpop.permute.xlu0 %2243
    %2245 = vrot.lane.b32.xlu0 %v2143, 16
    %v2246 = vpop.permute.xlu0 %2245
    %2251 = vrot.lane.b32.xlu0 %v2225, 24
    %v2252 = vpop.permute.xlu0 %2251
    %2253 = vrot.lane.b32.xlu0 %v2230, 24
    %v2254 = vpop.permute.xlu0 %2253
    %v2257 = vsel %vm268, %v1964, %v2236
    %v2258 = vsel %vm268, %v1969, %v2238
    %v2259 = vsel %vm621, %v2257, %v2244
    %v2260 = vsel %vm621, %v2258, %v2246
    %v2261 = vsel %vm1086, %v2259, %v2252
    %v2262 = vsel %vm1086, %v2260, %v2254
    %v2263 = vld [vmem:[#allocation10 + $0x18] sm:$0xff]
    %v2264 = vld [vmem:[#allocation10 + $0x48] sm:$0xff]
    %v2265 = vld [vmem:[#allocation10 + $0x78] sm:$0xff]
    %v2266 = vld [vmem:[#allocation10 + $0xa8] sm:$0xff]
    %v2267 = vld [vmem:[%s5 + $0x3] sm:$0x1]
    %v2269 = vlaneseq
    %v2270 = vshrl.u32 %v2269, 7
    %v2271 = vsub.s32 0, %v2270
    %v2272 = vrot.slane %v2267, %v2271
    %v2275 = vsel %vm104, %v2261, 0
    %v2278 = vsel %vm104, %v2262, 0
    %2280 = vmatprep.subr.mxu0 0.0
    %2281 = vmatpush1.msra.mxu0 0.0
    %2282 = vmatprep.subr.mxu0 0.0
    %2283 = vmatpush1.msra.mxu0 0.0
    %2284 = vmatprep.subr.mxu0 0.0
    %2285 = vmatpush1.msra.mxu0 0.0
    %2286 = vmatprep.subr.mxu0 0.0
    %2287 = vmatpush1.msra.mxu0 0.0
    %2288 = vmatprep.subr.mxu0 0.0
    %2289 = vmatpush1.msra.mxu0 0.0
    %2290 = vmatprep.subr.mxu0 0.0
    %2291 = vmatpush1.msra.mxu0 0.0
    %2292 = vmatprep.subr.mxu0 0.0
    %2293 = vmatpush1.msra.mxu0 0.0
    %2294 = vmatprep.subr.mxu0 0.0
    %2295 = vmatpush1.msra.mxu0 0.0
    %2296 = vmatprep.subr.mxu0 0.0
    %2297 = vmatpush1.msra.mxu0 0.0
    %2298 = vmatprep.subr.mxu0 0.0
    %2299 = vmatpush1.msra.mxu0 0.0
    %2300 = vmatprep.subr.mxu0 0.0
    %2301 = vmatpush1.msra.mxu0 0.0
    %2302 = vmatprep.subr.mxu0 0.0
    %2303 = vmatpush1.msra.mxu0 0.0
    %2304 = vmatprep.subr.mxu0 0.0
    %2305 = vmatpush1.msra.mxu0 %v2266
    %2306 = vmatprep.subr.mxu0 0.0
    %2307 = vmatpush1.msra.mxu0 %v2265
    %2308 = vmatprep.subr.mxu0 0.0
    %2309 = vmatpush1.msra.mxu0 %v2264
    %2310 = vmatprep.subr.mxu0 0.0
    %2311 = vmatpush1.msra.mxu0 %v2263
    %2312 = vmatprep.subr.mxu0 0.0
    %2313 = vmatpush2.msra.mxu0 0.0
    %2314 = vmatprep.subr.mxu0 0.0
    %2315 = vmatpush2.msra.mxu0 0.0
    %2316 = vmatprep.subr.mxu0 0.0
    %2317 = vmatpush2.msra.mxu0 0.0
    %2318 = vmatprep.subr.mxu0 0.0
    %2319 = vmatpush2.msra.mxu0 0.0
    %2320 = vmatprep.subr.mxu0 0.0
    %2321 = vmatpush2.msra.mxu0 0.0
    %2322 = vmatprep.subr.mxu0 0.0
    %2323 = vmatpush2.msra.mxu0 0.0
    %2324 = vmatprep.subr.mxu0 0.0
    %2325 = vmatpush2.msra.mxu0 0.0
    %2326 = vmatprep.subr.mxu0 0.0
    %2327 = vmatpush2.msra.mxu0 0.0
    %2328 = vmatprep.subr.mxu0 0.0
    %2329 = vmatpush2.msra.mxu0 0.0
    %2330 = vmatprep.subr.mxu0 0.0
    %2331 = vmatpush2.msra.mxu0 0.0
    %2332 = vmatprep.subr.mxu0 0.0
    %2333 = vmatpush2.msra.mxu0 0.0
    %2334 = vmatprep.subr.mxu0 0.0
    %2335 = vmatpush2.msra.mxu0 0.0
    %2336 = vmatprep.subr.mxu0 0.0
    %2337 = vmatpush2.msra.mxu0 0.0
    %2338 = vmatprep.subr.mxu0 0.0
    %2339 = vmatpush2.msra.mxu0 0.0
    %2340 = vmatprep.subr.mxu0 0.0
    %2341 = vmatpush2.msra.mxu0 0.0
    %2342 = vmatprep.subr.mxu0 0.0
    %2343 = vmatpush2.msra.mxu0 0.0
    %2344 = vmatprep.mubr.f32.mxu0 0.0
    %2345 = vmatmul.mubr.f32.gmra.mxu0 %v2275
    %v2346 = vpop.f32.mrf.mxu0
    %v2347 = vadd.f32 %v2272, %v2346
    %v2348 = vpop.f32.mrf.mxu0
    %2349 = vmatprep.mubr.f32.mxu0 0.0
    %2350 = vmatmul.mubr.f32.gmra.mxu0 %v2278
    %v2351 = vpop.f32.mrf.mxu0
    %v2352 = vadd.f32 %v2272, %v2351
    %v2353 = vpop.f32.mrf.mxu0
    %2354 = vdwg.mxu0
    %v2355 = vadd.f32 %v1181, %v2347
    %v2356 = vadd.f32 %v1182, %v2352
    %v2357 = vld [vmem:[%s6 + $0x4] sm:$0x1]
    %v2358 = vld [vmem:[%s6 + $0x5] sm:$0x1]
    %v2359 = vsel %vm104, %v2355, 0.0
    %2360 = vadd.xlane.f32.xlu0 %v2359
    %v2361 = vpop.xlane.xlu0 %2360
    %v2362 = vsel %vm104, %v2356, 0.0
    %2363 = vadd.xlane.f32.xlu0 %v2362
    %v2364 = vpop.xlane.xlu0 %2363
    %v2365 = vmul.f32 %v2361, %v111
    %v2366 = vmul.f32 %v2364, %v111
    %v2367 = vsub.f32 %v2355, %v2365
    %v2368 = vsub.f32 %v2356, %v2366
    %v2369 = vmul.f32 %v2367, %v2367
    %v2370 = vmul.f32 %v2368, %v2368
    %v2371 = vsel %vm104, %v2369, 0.0
    %2372 = vadd.xlane.f32.xlu0 %v2371
    %v2373 = vpop.xlane.xlu0 %2372
    %v2374 = vsel %vm104, %v2370, 0.0
    %2375 = vadd.xlane.f32.xlu0 %v2374
    %v2376 = vpop.xlane.xlu0 %2375
    %v2377 = vmul.f32 %v2373, %v111
    %v2378 = vmul.f32 %v2376, %v111
    %v2379 = vadd.f32 %v2377, 1e-05
    %v2380 = vadd.f32 %v2378, 1e-05
    %v2381 = vrsqrt.pop %v2379
    %v2382 = vrsqrt.pop %v2380
    %v2383 = vmul.f32 %v2367, %v2381
    %v2384 = vmul.f32 %v2368, %v2382
    %v2385 = vlaneseq
    %v2386 = vshrl.u32 %v2385, 7
    %v2387 = vsub.s32 0, %v2386
    %v2388 = vrot.slane %v2357, %v2387
    %v2389 = vmul.f32 %v2383, %v2388
    %v2390 = vmul.f32 %v2384, %v2388
    %v2391 = vlaneseq
    %v2392 = vshrl.u32 %v2391, 7
    %v2393 = vsub.s32 0, %v2392
    %v2394 = vrot.slane %v2358, %v2393
    %v2395 = vadd.f32 %v2389, %v2394
    %v2396 = vadd.f32 %v2390, %v2394
    %v2397 = vld [vmem:[#allocation10 + $0x20] sm:$0xff]
    %v2398 = vld [vmem:[#allocation10 + $0x50] sm:$0xff]
    %v2399 = vld [vmem:[#allocation10 + $0x80] sm:$0xff]
    %v2400 = vld [vmem:[#allocation10 + $0xb0] sm:$0xff]
    %v2401 = vld [vmem:[%s5 + $0x4] sm:$0x1]
    %v2403 = vlaneseq
    %v2404 = vshrl.u32 %v2403, 7
    %v2405 = vsub.s32 0, %v2404
    %v2406 = vrot.slane %v2401, %v2405
    %v2409 = vsel %vm104, %v2395, 0
    %v2412 = vsel %vm104, %v2396, 0
    %2414 = vmatprep.subr.mxu0 0.0
    %2415 = vmatpush1.msra.mxu0 0.0
    %2416 = vmatprep.subr.mxu0 0.0
    %2417 = vmatpush1.msra.mxu0 0.0
    %2418 = vmatprep.subr.mxu0 0.0
    %2419 = vmatpush1.msra.mxu0 0.0
    %2420 = vmatprep.subr.mxu0 0.0
    %2421 = vmatpush1.msra.mxu0 0.0
    %2422 = vmatprep.subr.mxu0 0.0
    %2423 = vmatpush1.msra.mxu0 0.0
    %2424 = vmatprep.subr.mxu0 0.0
    %2425 = vmatpush1.msra.mxu0 0.0
    %2426 = vmatprep.subr.mxu0 0.0
    %2427 = vmatpush1.msra.mxu0 0.0
    %2428 = vmatprep.subr.mxu0 0.0
    %2429 = vmatpush1.msra.mxu0 0.0
    %2430 = vmatprep.subr.mxu0 0.0
    %2431 = vmatpush1.msra.mxu0 0.0
    %2432 = vmatprep.subr.mxu0 0.0
    %2433 = vmatpush1.msra.mxu0 0.0
    %2434 = vmatprep.subr.mxu0 0.0
    %2435 = vmatpush1.msra.mxu0 0.0
    %2436 = vmatprep.subr.mxu0 0.0
    %2437 = vmatpush1.msra.mxu0 0.0
    %2438 = vmatprep.subr.mxu0 0.0
    %2439 = vmatpush1.msra.mxu0 %v2400
    %2440 = vmatprep.subr.mxu0 0.0
    %2441 = vmatpush1.msra.mxu0 %v2399
    %2442 = vmatprep.subr.mxu0 0.0
    %2443 = vmatpush1.msra.mxu0 %v2398
    %2444 = vmatprep.subr.mxu0 0.0
    %2445 = vmatpush1.msra.mxu0 %v2397
    %2446 = vmatprep.subr.mxu0 0.0
    %2447 = vmatpush2.msra.mxu0 0.0
    %2448 = vmatprep.subr.mxu0 0.0
    %2449 = vmatpush2.msra.mxu0 0.0
    %2450 = vmatprep.subr.mxu0 0.0
    %2451 = vmatpush2.msra.mxu0 0.0
    %2452 = vmatprep.subr.mxu0 0.0
    %2453 = vmatpush2.msra.mxu0 0.0
    %2454 = vmatprep.subr.mxu0 0.0
    %2455 = vmatpush2.msra.mxu0 0.0
    %2456 = vmatprep.subr.mxu0 0.0
    %2457 = vmatpush2.msra.mxu0 0.0
    %2458 = vmatprep.subr.mxu0 0.0
    %2459 = vmatpush2.msra.mxu0 0.0
    %2460 = vmatprep.subr.mxu0 0.0
    %2461 = vmatpush2.msra.mxu0 0.0
    %2462 = vmatprep.subr.mxu0 0.0
    %2463 = vmatpush2.msra.mxu0 0.0
    %2464 = vmatprep.subr.mxu0 0.0
    %2465 = vmatpush2.msra.mxu0 0.0
    %2466 = vmatprep.subr.mxu0 0.0
    %2467 = vmatpush2.msra.mxu0 0.0
    %2468 = vmatprep.subr.mxu0 0.0
    %2469 = vmatpush2.msra.mxu0 0.0
    %2470 = vmatprep.subr.mxu0 0.0
    %2471 = vmatpush2.msra.mxu0 0.0
    %2472 = vmatprep.subr.mxu0 0.0
    %2473 = vmatpush2.msra.mxu0 0.0
    %2474 = vmatprep.subr.mxu0 0.0
    %2475 = vmatpush2.msra.mxu0 0.0
    %2476 = vmatprep.subr.mxu0 0.0
    %2477 = vmatpush2.msra.mxu0 0.0
    %2478 = vmatprep.mubr.f32.mxu0 0.0
    %2479 = vmatmul.mubr.f32.gmra.mxu0 %v2409
    %v2480 = vpop.f32.mrf.mxu0
    %v2481 = vadd.f32 %v2406, %v2480
    %v2482 = vpop.f32.mrf.mxu0
    %2483 = vmatprep.mubr.f32.mxu0 0.0
    %2484 = vmatmul.mubr.f32.gmra.mxu0 %v2412
    %v2485 = vpop.f32.mrf.mxu0
    %v2486 = vadd.f32 %v2406, %v2485
    %v2487 = vpop.f32.mrf.mxu0
    %2488 = vdwg.mxu0
    %v2489 = vmax.f32 %v2481, 0.0
    %v2490 = vmax.f32 %v2486, 0.0
    %v2491 = vld [vmem:[#allocation10 + $0x28] sm:$0xff]
    %v2492 = vld [vmem:[#allocation10 + $0x58] sm:$0xff]
    %v2493 = vld [vmem:[#allocation10 + $0x88] sm:$0xff]
    %v2494 = vld [vmem:[#allocation10 + $0xb8] sm:$0xff]
    %v2495 = vld [vmem:[%s5 + $0x5] sm:$0x1]
    %v2497 = vlaneseq
    %v2498 = vshrl.u32 %v2497, 7
    %v2499 = vsub.s32 0, %v2498
    %v2500 = vrot.slane %v2495, %v2499
    %v2503 = vsel %vm104, %v2489, 0
    %v2506 = vsel %vm104, %v2490, 0
    %2508 = vmatprep.subr.mxu0 0.0
    %2509 = vmatpush1.msra.mxu0 0.0
    %2510 = vmatprep.subr.mxu0 0.0
    %2511 = vmatpush1.msra.mxu0 0.0
    %2512 = vmatprep.subr.mxu0 0.0
    %2513 = vmatpush1.msra.mxu0 0.0
    %2514 = vmatprep.subr.mxu0 0.0
    %2515 = vmatpush1.msra.mxu0 0.0
    %2516 = vmatprep.subr.mxu0 0.0
    %2517 = vmatpush1.msra.mxu0 0.0
    %2518 = vmatprep.subr.mxu0 0.0
    %2519 = vmatpush1.msra.mxu0 0.0
    %2520 = vmatprep.subr.mxu0 0.0
    %2521 = vmatpush1.msra.mxu0 0.0
    %2522 = vmatprep.subr.mxu0 0.0
    %2523 = vmatpush1.msra.mxu0 0.0
    %2524 = vmatprep.subr.mxu0 0.0
    %2525 = vmatpush1.msra.mxu0 0.0
    %2526 = vmatprep.subr.mxu0 0.0
    %2527 = vmatpush1.msra.mxu0 0.0
    %2528 = vmatprep.subr.mxu0 0.0
    %2529 = vmatpush1.msra.mxu0 0.0
    %2530 = vmatprep.subr.mxu0 0.0
    %2531 = vmatpush1.msra.mxu0 0.0
    %2532 = vmatprep.subr.mxu0 0.0
    %2533 = vmatpush1.msra.mxu0 %v2494
    %2534 = vmatprep.subr.mxu0 0.0
    %2535 = vmatpush1.msra.mxu0 %v2493
    %2536 = vmatprep.subr.mxu0 0.0
    %2537 = vmatpush1.msra.mxu0 %v2492
    %2538 = vmatprep.subr.mxu0 0.0
    %2539 = vmatpush1.msra.mxu0 %v2491
    %2540 = vmatprep.subr.mxu0 0.0
    %2541 = vmatpush2.msra.mxu0 0.0
    %2542 = vmatprep.subr.mxu0 0.0
    %2543 = vmatpush2.msra.mxu0 0.0
    %2544 = vmatprep.subr.mxu0 0.0
    %2545 = vmatpush2.msra.mxu0 0.0
    %2546 = vmatprep.subr.mxu0 0.0
    %2547 = vmatpush2.msra.mxu0 0.0
    %2548 = vmatprep.subr.mxu0 0.0
    %2549 = vmatpush2.msra.mxu0 0.0
    %2550 = vmatprep.subr.mxu0 0.0
    %2551 = vmatpush2.msra.mxu0 0.0
    %2552 = vmatprep.subr.mxu0 0.0
    %2553 = vmatpush2.msra.mxu0 0.0
    %2554 = vmatprep.subr.mxu0 0.0
    %2555 = vmatpush2.msra.mxu0 0.0
    %2556 = vmatprep.subr.mxu0 0.0
    %2557 = vmatpush2.msra.mxu0 0.0
    %2558 = vmatprep.subr.mxu0 0.0
    %2559 = vmatpush2.msra.mxu0 0.0
    %2560 = vmatprep.subr.mxu0 0.0
    %2561 = vmatpush2.msra.mxu0 0.0
    %2562 = vmatprep.subr.mxu0 0.0
    %2563 = vmatpush2.msra.mxu0 0.0
    %2564 = vmatprep.subr.mxu0 0.0
    %2565 = vmatpush2.msra.mxu0 0.0
    %2566 = vmatprep.subr.mxu0 0.0
    %2567 = vmatpush2.msra.mxu0 0.0
    %2568 = vmatprep.subr.mxu0 0.0
    %2569 = vmatpush2.msra.mxu0 0.0
    %2570 = vmatprep.subr.mxu0 0.0
    %2571 = vmatpush2.msra.mxu0 0.0
    %2572 = vmatprep.mubr.f32.mxu0 0.0
    %2573 = vmatmul.mubr.f32.gmra.mxu0 %v2503
    %v2574 = vpop.f32.mrf.mxu0
    %v2575 = vadd.f32 %v2500, %v2574
    %v2576 = vpop.f32.mrf.mxu0
    %2577 = vmatprep.mubr.f32.mxu0 0.0
    %2578 = vmatmul.mubr.f32.gmra.mxu0 %v2506
    %v2579 = vpop.f32.mrf.mxu0
    %v2580 = vadd.f32 %v2500, %v2579
    %v2581 = vpop.f32.mrf.mxu0
    %2582 = vdwg.mxu0
    %v2583 = vadd.f32 %v2575, %v2395
    %v2584 = vadd.f32 %v2580, %v2396
    %2585 = vst.msk [vmem:[#allocation11] sm:$0xff] %vm104, %v2583
    %2586 = vst.msk [vmem:[#allocation11 + $0x8] sm:$0xff] %vm104, %v2584
    // Predicated region
    $region50: #{decoder_block_pallas.1} parent=1 // pred_check
      _
    $region51: #{decoder_block_pallas.1} parent=1 // pred_check_branch
      %2588 = sbr.rel (0) target = $region53
    $region52: #{decoder_block_pallas.1} parent=1 // pred_region
      %s2590 = ssub.s32 256, 256
      %2591 = vsyncadd [#allocation4], %s2590
      %s2592 = sshll.u32 [#allocation11], 4
      %s2593 = int_to_ptr.vmem [resolvable:$true] %s2592
      %2598 = dma.vmem_to_hbm [thread:$0]  %s2593, 256, %s7, [#allocation4], 128, 128, 8
    $region53: #{decoder_block_pallas.1} parent=1 // pred_fallthru
      _
    // Predicated region
    $region54: #{decoder_block_pallas.1} parent=1 // pred_check
      _
    $region55: #{decoder_block_pallas.1} parent=1 // pred_check_branch
      %2600 = sbr.rel (0) target = $region57
    $region56: #{decoder_block_pallas.1} parent=1 // pred_region
      %2601 = dma.done [#allocation4], 256
    $region57: #{decoder_block_pallas.1} parent=1 // pred_fallthru
      _
    %2602 = vsyncpa [#allocation3], 1
    %2603 = vsyncpa [#allocation6], 1
    %2604 = vsyncpa [#allocation9], 1
    %2605 = vsyncpa [#allocation4], 1

</llo_original>
